<compile_context>
chip_gen: v5e
topology: v5e:2x2
jax: 0.10.0
libtpu: 0.0.40
codegen_flags: <defaults>
</compile_context>

<pallas_src>
import jax
import jax.numpy as jnp
from jax.experimental import pallas as pl
from jax.experimental.pallas import tpu as pltpu

B = 2        # batch
S = 8        # sequence length
H = 768      # hidden size (RoBERTa base)
A = 512      # attention head inner dim
VOCAB = 128  # synthetic vocab for the stand-in embedding


def head_kernel(h_ref, w1_ref, b1_ref, w2_ref, wr_ref, sb_ref, out_ref):
    # Whole batch in one invocation: h is (B*S, H) bf16.
    h = h_ref[...]
    # attention: Linear(768,512) -> Tanh   (bf16 MXU matmul, f32 accumulation)
    a = jnp.tanh(
        jnp.dot(h, w1_ref[...], preferred_element_type=jnp.float32) + b1_ref[...]
    )                                                        # (B*S, A) f32
    # Linear(512,1): row-vector W2 -> VPU multiply + lane reduction (no N=1 MXU op)
    scores = jnp.sum(a * w2_ref[...], axis=-1, keepdims=True) + sb_ref[0]   # (B*S, 1)
    wr_row = wr_ref[...]                                     # (1, H) f32

    # Per-sequence softmax + weighted hidden-state sum + regressor.  Each sequence
    # occupies one aligned 8-sublane group; B=2 is fully unrolled and each batch's
    # scalar is stored straight into its output row (no ctx concatenation).
    for b in range(B):                                       # static unroll
        s_b = scores[b * S:(b + 1) * S, :]                   # (S, 1) f32
        h_b = h[b * S:(b + 1) * S, :]                        # (S, H) bf16
        m = jnp.max(s_b, axis=0, keepdims=True)
        e = jnp.exp(s_b - m)
        wts = e * pl.reciprocal(jnp.sum(e, axis=0, keepdims=True), approx=True)
        ctx = jnp.sum(wts * h_b, axis=0, keepdims=True)      # (1, H) f32 (promoted)
        # regressor: Linear(768,1) as row-vector Wr -> lane reduction, (1,1) store.
        out_ref[b:b + 1, :] = (
            jnp.sum(ctx * wr_row, axis=-1, keepdims=True) + sb_ref[1])


def litmodel_head(hidden_bf16, w1_bf16, b1, w2, b2, wr, br):
    # hidden_bf16: (B, S, H) bf16; w1_bf16: (H, A) bf16; b1: (1, A); w2: (A, 1);
    # b2: (1, 1); wr: (H, 1); br: (1, 1)  ->  (B, 1) f32
    h2d = hidden_bf16.reshape(B * S, H)             # fuse batch into the MXU M dim
    w2_row = w2.reshape(1, A)                       # lane-dense row vector
    wr_row = wr.reshape(1, H)                       # lane-dense row vector
    scalars = jnp.concatenate(
        [b2.reshape(-1), br.reshape(-1)]).astype(jnp.float32)     # (2,) -> SMEM

    flops = (2 * (B * S) * H * A      # main matmul
             + 2 * (B * S) * A        # W2 row reduction
             + 2 * (B * S) * H        # weighted hidden sum
             + 2 * B * H)             # regressor
    transcendentals = (B * S) * A + (B * S) + B     # tanh + exp + reciprocal
    bytes_accessed = (H * A * 2            # W1 (bf16)  -- dominant
                      + (B * S) * H * 2    # hidden (bf16)
                      + (A + A + H) * 4    # b1, W2 row, Wr row
                      + 2 * 4 + B * 4)     # SMEM scalars + output

    vmem = pl.BlockSpec(memory_space=pltpu.MemorySpace.VMEM)
    return pl.pallas_call(
        head_kernel,
        out_shape=jax.ShapeDtypeStruct((B, 1), jnp.float32),
        # grid=() : single invocation, whole-array blocks, no pipeline machinery.
        in_specs=[
            vmem,                                               # hidden (bf16)
            vmem,                                               # W1 (bf16)
            vmem,                                               # b1
            vmem,                                               # W2 as row vector
            vmem,                                               # Wr as row vector
            pl.BlockSpec(memory_space=pltpu.MemorySpace.SMEM),  # [b2, br] scalars
        ],
        out_specs=vmem,
        cost_estimate=pl.CostEstimate(
            flops=flops, transcendentals=transcendentals,
            bytes_accessed=bytes_accessed),
    )(h2d, w1_bf16, b1, w2_row, wr_row, scalars)


def reference_head(hidden, w1_f32, b1, w2, b2, wr, br):
    a = jnp.tanh(hidden @ w1_f32 + b1)              # (B, S, A)
    s = a @ w2 + b2                                 # (B, S, 1)
    w = jax.nn.softmax(s, axis=1)                   # softmax over seq dim
    ctx = jnp.sum(w * hidden, axis=1)               # (B, H)
    return ctx @ wr + br                            # (B, 1)


if __name__ == "__main__":
    key = jax.random.PRNGKey(0)
    k_emb, k_w1, k_b1, k_w2, k_b2, k_wr, k_br, k_ids = jax.random.split(key, 8)

    # Deterministic synthetic parameters (shapes from the module's __init__).
    # Backbone output is bf16 (as a bf16 RoBERTa on TPU would emit); the reference
    # consumes the identical bf16-rounded values upcast to f32, so the comparison
    # isolates the kernel's own arithmetic.
    emb_table = (jax.random.normal(k_emb, (VOCAB, H), jnp.float32) * 0.02
                 ).astype(jnp.bfloat16)
    w1_bf16 = (jax.random.normal(k_w1, (H, A), jnp.float32) * 0.02
               ).astype(jnp.bfloat16)
    w1_f32 = w1_bf16.astype(jnp.float32)
    b1 = jax.random.normal(k_b1, (1, A), jnp.float32) * 0.02
    w2 = jax.random.normal(k_w2, (A, 1), jnp.float32) * 0.02
    b2 = jax.random.normal(k_b2, (1, 1), jnp.float32) * 0.02
    wr = jax.random.normal(k_wr, (H, 1), jnp.float32) * 0.02
    br = jax.random.normal(k_br, (1, 1), jnp.float32) * 0.02

    # Inputs matching the PyTorch forward signature.
    input_ids = jax.random.randint(k_ids, (B, S), 0, VOCAB, dtype=jnp.int32)
    # attention_mask is consumed only by the (stubbed) backbone; the PyTorch pooling
    # head applies Softmax(dim=1) with no masking, which the kernel matches exactly.
    attention_mask = jnp.ones((B, S), jnp.int32)

    # Stand-in for roberta(...).hidden_states[-1]  (glue, plain JAX), bf16.
    last_layer_hidden_states = emb_table[input_ids]          # (B, S, H) bf16

    out = litmodel_head(last_layer_hidden_states, w1_bf16, b1, w2, b2, wr, br)
    out = jax.block_until_ready(out)

    ref = reference_head(last_layer_hidden_states.astype(jnp.float32),
                         w1_f32, b1, w2, b2, wr, br)
    assert out.shape == (B, 1)
    # Kernel and reference see identical bf16-rounded hidden states / W1; remaining
    # deltas (MXU f32 accumulation order, approx softmax reciprocal) are O(1e-6).
    assert jnp.allclose(out, ref, atol=1e-4, rtol=1e-4)

    print("KERNEL_OK")
</pallas_src>

<mosaic_0001>
module attributes {stable_mosaic.version = 11 : i64} {
  func.func @head_kernel(%arg0: memref<16x768xbf16, #tpu.memory_space<vmem>>, %arg1: memref<768x512xbf16, #tpu.memory_space<vmem>>, %arg2: memref<1x512xf32, #tpu.memory_space<vmem>>, %arg3: memref<1x512xf32, #tpu.memory_space<vmem>>, %arg4: memref<1x768xf32, #tpu.memory_space<vmem>>, %arg5: memref<2xf32, #tpu.memory_space<smem>>, %arg6: memref<2x1xf32, #tpu.memory_space<vmem>>) attributes {dimension_semantics = [], scalar_prefetch = 0 : i64, scratch_operands = 0 : i64, tpu.core_type = #tpu.core_type<tc>} {
    %c0 = arith.constant 0 : index
    %c0_0 = arith.constant 0 : index
    %0 = vector.load %arg0[%c0, %c0_0] : memref<16x768xbf16, #tpu.memory_space<vmem>>, vector<16x768xbf16>
    %c0_1 = arith.constant 0 : index
    %c0_2 = arith.constant 0 : index
    %1 = vector.load %arg1[%c0_1, %c0_2] : memref<768x512xbf16, #tpu.memory_space<vmem>>, vector<768x512xbf16>
    %cst = arith.constant dense<0.000000e+00> : vector<16x512xf32>
    %2 = tpu.matmul %0, %1, %cst {dimension_numbers = #tpu.dot_dimension_numbers<[1], [0], [0], [1], [0, 0, 1, 1], [], []>} : vector<16x768xbf16>, vector<768x512xbf16>, vector<16x512xf32> -> vector<16x512xf32>
    %c0_3 = arith.constant 0 : index
    %c0_4 = arith.constant 0 : index
    %3 = vector.load %arg2[%c0_3, %c0_4] : memref<1x512xf32, #tpu.memory_space<vmem>>, vector<1x512xf32>
    %4 = vector.broadcast %3 : vector<1x512xf32> to vector<16x512xf32>
    %5 = arith.addf %2, %4 : vector<16x512xf32>
    %6 = math.tanh %5 : vector<16x512xf32>
    %c0_5 = arith.constant 0 : index
    %c0_6 = arith.constant 0 : index
    %7 = vector.load %arg3[%c0_5, %c0_6] : memref<1x512xf32, #tpu.memory_space<vmem>>, vector<1x512xf32>
    %8 = vector.broadcast %7 : vector<1x512xf32> to vector<16x512xf32>
    %9 = arith.mulf %6, %8 : vector<16x512xf32>
    %cst_7 = arith.constant dense<0.000000e+00> : vector<16xf32>
    %10 = vector.multi_reduction <add>, %9, %cst_7 [1] : vector<16x512xf32> to vector<16xf32>
    %11 = vector.shape_cast %10 : vector<16xf32> to vector<16x1xf32>
    %c0_8 = arith.constant 0 : index
    %12 = memref.load %arg5[%c0_8] : memref<2xf32, #tpu.memory_space<smem>>
    %13 = vector.broadcast %12 : f32 to vector<16x1xf32>
    %14 = arith.addf %11, %13 : vector<16x1xf32>
    %c0_9 = arith.constant 0 : index
    %c0_10 = arith.constant 0 : index
    %15 = vector.load %arg4[%c0_9, %c0_10] : memref<1x768xf32, #tpu.memory_space<vmem>>, vector<1x768xf32>
    %16 = vector.extract_strided_slice %14 {offsets = [0, 0], sizes = [8, 1], strides = [1, 1]} : vector<16x1xf32> to vector<8x1xf32>
    %17 = vector.extract_strided_slice %0 {offsets = [0, 0], sizes = [8, 768], strides = [1, 1]} : vector<16x768xbf16> to vector<8x768xbf16>
    %cst_11 = arith.constant dense<0xFF800000> : vector<1xf32>
    %18 = vector.multi_reduction <maximumf>, %16, %cst_11 [0] : vector<8x1xf32> to vector<1xf32>
    %19 = vector.shape_cast %18 : vector<1xf32> to vector<1x1xf32>
    %20 = vector.broadcast %19 : vector<1x1xf32> to vector<8x1xf32>
    %21 = arith.subf %16, %20 : vector<8x1xf32>
    %22 = math.exp %21 : vector<8x1xf32>
    %cst_12 = arith.constant dense<0.000000e+00> : vector<1xf32>
    %23 = vector.multi_reduction <add>, %22, %cst_12 [0] : vector<8x1xf32> to vector<1xf32>
    %24 = vector.shape_cast %23 : vector<1xf32> to vector<1x1xf32>
    %25 = tpu.reciprocal %24 {approx = true} : vector<1x1xf32> -> vector<1x1xf32>
    %26 = vector.broadcast %25 : vector<1x1xf32> to vector<8x1xf32>
    %27 = arith.mulf %22, %26 : vector<8x1xf32>
    %28 = arith.extf %17 : vector<8x768xbf16> to vector<8x768xf32>
    %29 = vector.broadcast %27 : vector<8x1xf32> to vector<8x768xf32>
    %30 = arith.mulf %29, %28 : vector<8x768xf32>
    %cst_13 = arith.constant dense<0.000000e+00> : vector<768xf32>
    %31 = vector.multi_reduction <add>, %30, %cst_13 [0] : vector<8x768xf32> to vector<768xf32>
    %32 = vector.shape_cast %31 : vector<768xf32> to vector<1x768xf32>
    %33 = arith.mulf %32, %15 : vector<1x768xf32>
    %cst_14 = arith.constant dense<0.000000e+00> : vector<1xf32>
    %34 = vector.multi_reduction <add>, %33, %cst_14 [1] : vector<1x768xf32> to vector<1xf32>
    %35 = vector.shape_cast %34 : vector<1xf32> to vector<1x1xf32>
    %c1 = arith.constant 1 : index
    %36 = memref.load %arg5[%c1] : memref<2xf32, #tpu.memory_space<smem>>
    %37 = vector.broadcast %36 : f32 to vector<1x1xf32>
    %38 = arith.addf %35, %37 : vector<1x1xf32>
    %c0_15 = arith.constant 0 : index
    %c0_16 = arith.constant 0 : index
    %39 = vector.load %arg6[%c0_15, %c0_16] : memref<2x1xf32, #tpu.memory_space<vmem>>, vector<1x1xf32>
    tpu.vector_store %arg6[%c0_15, %c0_16], %38 {strides = array<i32>} : memref<2x1xf32, #tpu.memory_space<vmem>>, vector<1x1xf32>,
    %40 = vector.extract_strided_slice %14 {offsets = [8, 0], sizes = [8, 1], strides = [1, 1]} : vector<16x1xf32> to vector<8x1xf32>
    %41 = vector.extract_strided_slice %0 {offsets = [8, 0], sizes = [8, 768], strides = [1, 1]} : vector<16x768xbf16> to vector<8x768xbf16>
    %cst_17 = arith.constant dense<0xFF800000> : vector<1xf32>
    %42 = vector.multi_reduction <maximumf>, %40, %cst_17 [0] : vector<8x1xf32> to vector<1xf32>
    %43 = vector.shape_cast %42 : vector<1xf32> to vector<1x1xf32>
    %44 = vector.broadcast %43 : vector<1x1xf32> to vector<8x1xf32>
    %45 = arith.subf %40, %44 : vector<8x1xf32>
    %46 = math.exp %45 : vector<8x1xf32>
    %cst_18 = arith.constant dense<0.000000e+00> : vector<1xf32>
    %47 = vector.multi_reduction <add>, %46, %cst_18 [0] : vector<8x1xf32> to vector<1xf32>
    %48 = vector.shape_cast %47 : vector<1xf32> to vector<1x1xf32>
    %49 = tpu.reciprocal %48 {approx = true} : vector<1x1xf32> -> vector<1x1xf32>
    %50 = vector.broadcast %49 : vector<1x1xf32> to vector<8x1xf32>
    %51 = arith.mulf %46, %50 : vector<8x1xf32>
    %52 = arith.extf %41 : vector<8x768xbf16> to vector<8x768xf32>
    %53 = vector.broadcast %51 : vector<8x1xf32> to vector<8x768xf32>
    %54 = arith.mulf %53, %52 : vector<8x768xf32>
    %cst_19 = arith.constant dense<0.000000e+00> : vector<768xf32>
    %55 = vector.multi_reduction <add>, %54, %cst_19 [0] : vector<8x768xf32> to vector<768xf32>
    %56 = vector.shape_cast %55 : vector<768xf32> to vector<1x768xf32>
    %57 = arith.mulf %56, %15 : vector<1x768xf32>
    %cst_20 = arith.constant dense<0.000000e+00> : vector<1xf32>
    %58 = vector.multi_reduction <add>, %57, %cst_20 [1] : vector<1x768xf32> to vector<1xf32>
    %59 = vector.shape_cast %58 : vector<1xf32> to vector<1x1xf32>
    %c1_21 = arith.constant 1 : index
    %60 = memref.load %arg5[%c1_21] : memref<2xf32, #tpu.memory_space<smem>>
    %61 = vector.broadcast %60 : f32 to vector<1x1xf32>
    %62 = arith.addf %59, %61 : vector<1x1xf32>
    %c1_22 = arith.constant 1 : index
    %c0_23 = arith.constant 0 : index
    %63 = vector.load %arg6[%c1_22, %c0_23] : memref<2x1xf32, #tpu.memory_space<vmem>>, vector<1x1xf32>
    tpu.vector_store %arg6[%c1_22, %c0_23], %62 {strides = array<i32>} : memref<2x1xf32, #tpu.memory_space<vmem>>, vector<1x1xf32>,
    return
  }
}

</mosaic_0001>

<llo_original>
// kernel: tpu_custom_call.1
$region0: #{tpu_custom_call.1}
  #allocation0 [shape = 'u32[]', space=smem, size = 0x4, offset = 0x4, fixed_abs, tag = 'smem constant byte address 0x4 - core index']
  #allocation1 [shape = 'u32[72,128]{1,0:T(1,128)}', space=vmem, size = 0x9000, scoped, tag = 'internal scratch']
  %s0 = inlined_call_operand.hbm [shape: bf16[16,768], index: 0, kind: input, shape index: {}]
  %s1 = inlined_call_operand.hbm [shape: bf16[768,512], index: 1, kind: input, shape index: {}]
  %s2 = inlined_call_operand.hbm [shape: f32[1,512], index: 2, kind: input, shape index: {}]
  %s3 = inlined_call_operand.hbm [shape: f32[1,512], index: 3, kind: input, shape index: {}]
  %s4 = inlined_call_operand.hbm [shape: f32[1,768], index: 4, kind: input, shape index: {}]
  %s5 = inlined_call_operand.vmem [shape: f32[2], index: 5, kind: input, shape index: {}]
  %s6 = inlined_call_operand.vmem [shape: f32[2,1], index: 6, kind: output, shape index: {}]
  %s7 = sld [smem:[#allocation0]]
  $region58: #{tpu_custom_call.1} parent=0
    _
  %s9 = ssub.s32 1, %s7
  %s10 = scalar_select 0, %s9, %s7
  $region1: #{tpu_custom_call.1} parent=0
    #allocation2 [shape = 'u8[24576]{0}', space=vmem, size = 0x6000, scoped, tag = 'input window, operand 0, single buffered']
    #allocation3 [shape = 's32[1]{0}', space=sflag, size = 0x4, scoped, tag = 'scoped memory for tpu_custom_call.1']
    #allocation4 [shape = 's32[1]{0}', space=sflag, size = 0x4, scoped, tag = 'scoped memory for tpu_custom_call.1']
    #allocation5 [shape = 'u8[786432]{0}', space=vmem, size = 0xc0000, scoped, tag = 'input window, operand 1, single buffered']
    #allocation6 [shape = 's32[1]{0}', space=sflag, size = 0x4, scoped, tag = 'scoped memory for tpu_custom_call.1']
    #allocation7 [shape = 'u8[2048]{0}', space=vmem, size = 0x800, scoped, tag = 'input window, operand 2, single buffered']
    #allocation8 [shape = 'u8[2048]{0}', space=vmem, size = 0x800, scoped, tag = 'input window, operand 3, single buffered']
    #allocation9 [shape = 's32[1]{0}', space=sflag, size = 0x4, scoped, tag = 'scoped memory for tpu_custom_call.1']
    #allocation10 [shape = 'u8[3072]{0}', space=vmem, size = 0xc00, scoped, tag = 'input window, operand 4, single buffered']
    #allocation11 [shape = 'u8[512]{0}', space=smem, size = 0x200, scoped, tag = 'input window, operand 5, single buffered']
    %11 = vsyncpa [#allocation3], 0
    %12 = vsyncpa [#allocation6], 0
    %13 = vsyncpa [#allocation9], 0
    %14 = vsyncpa [#allocation4], 0
    // Predicated region
    $region2: #{tpu_custom_call.1} parent=1 // pred_check
      _
    $region3: #{tpu_custom_call.1} parent=1 // pred_check_branch
      %16 = sbr.rel (0) target = $region5
    $region4: #{tpu_custom_call.1} parent=1 // pred_region
      %18 = vsyncadd [#allocation3], 0
      %s19 = sshll.u32 %s0, 4
      %s20 = int_to_ptr.hbm [resolvable:$true] %s19
      %s21 = sshll.u32 [#allocation2], 4
      %s22 = int_to_ptr.vmem [resolvable:$true] %s21
      %27 = dma.hbm_to_vmem [thread:$0]  %s20, 768, %s22, [#allocation3], 384, 384, 24
    $region5: #{tpu_custom_call.1} parent=1 // pred_fallthru
      _
    // Predicated region
    $region6: #{tpu_custom_call.1} parent=1 // pred_check
      _
    $region7: #{tpu_custom_call.1} parent=1 // pred_check_branch
      %29 = sbr.rel (0) target = $region9
    $region8: #{tpu_custom_call.1} parent=1 // pred_region
      %31 = vsyncadd [#allocation6], 0
      %s32 = sshll.u32 %s1, 4
      %s33 = int_to_ptr.hbm [resolvable:$true] %s32
      %s34 = sshll.u32 [#allocation5], 4
      %s35 = int_to_ptr.vmem [resolvable:$true] %s34
      %40 = dma.hbm_to_vmem [thread:$0]  %s33, 24576, %s35, [#allocation6], 256, 256, 16
    $region9: #{tpu_custom_call.1} parent=1 // pred_fallthru
      _
    // Predicated region
    $region10: #{tpu_custom_call.1} parent=1 // pred_check
      _
    $region11: #{tpu_custom_call.1} parent=1 // pred_check_branch
      %42 = sbr.rel (0) target = $region13
    $region12: #{tpu_custom_call.1} parent=1 // pred_region
      %44 = vsyncadd [#allocation6], 0
      %s46 = sshll.u32 %s2, 4
      %s47 = int_to_ptr.hbm [resolvable:$true] %s46
      %s48 = sshll.u32 [#allocation7], 4
      %s49 = int_to_ptr.vmem [resolvable:$true] %s48
      %51 = dma.hbm_to_vmem [thread:$0]  %s47, 64, %s49, [#allocation6]
    $region13: #{tpu_custom_call.1} parent=1 // pred_fallthru
      _
    // Predicated region
    $region14: #{tpu_custom_call.1} parent=1 // pred_check
      _
    $region15: #{tpu_custom_call.1} parent=1 // pred_check_branch
      %53 = sbr.rel (0) target = $region17
    $region16: #{tpu_custom_call.1} parent=1 // pred_region
      %55 = vsyncadd [#allocation9], 0
      %s57 = sshll.u32 %s3, 4
      %s58 = int_to_ptr.hbm [resolvable:$true] %s57
      %s59 = sshll.u32 [#allocation8], 4
      %s60 = int_to_ptr.vmem [resolvable:$true] %s59
      %62 = dma.hbm_to_vmem [thread:$0]  %s58, 64, %s60, [#allocation9]
    $region17: #{tpu_custom_call.1} parent=1 // pred_fallthru
      _
    // Predicated region
    $region18: #{tpu_custom_call.1} parent=1 // pred_check
      _
    $region19: #{tpu_custom_call.1} parent=1 // pred_check_branch
      %64 = sbr.rel (0) target = $region21
    $region20: #{tpu_custom_call.1} parent=1 // pred_region
      %66 = vsyncadd [#allocation9], 0
      %s68 = sshll.u32 %s4, 4
      %s69 = int_to_ptr.hbm [resolvable:$true] %s68
      %s70 = sshll.u32 [#allocation10], 4
      %s71 = int_to_ptr.vmem [resolvable:$true] %s70
      %73 = dma.hbm_to_vmem [thread:$0]  %s69, 96, %s71, [#allocation9]
    $region21: #{tpu_custom_call.1} parent=1 // pred_fallthru
      _
    // Predicated region
    $region22: #{tpu_custom_call.1} parent=1 // pred_check
      _
    $region23: #{tpu_custom_call.1} parent=1 // pred_check_branch
      %75 = sbr.rel (0) target = $region25
    $region24: #{tpu_custom_call.1} parent=1 // pred_region
      %77 = vsyncadd [#allocation4], 0
      %s79 = sshll.u32 %s5, 4
      %s80 = int_to_ptr.vmem [resolvable:$true] %s79
      %82 = dma.vmem_to_smem %s80, 16, [#allocation11], [#allocation4]
    $region25: #{tpu_custom_call.1} parent=1 // pred_fallthru
      _
    // Predicated region
    $region26: #{tpu_custom_call.1} parent=1 // pred_check
      _
    $region27: #{tpu_custom_call.1} parent=1 // pred_check_branch
      %84 = sbr.rel (0) target = $region29
    $region28: #{tpu_custom_call.1} parent=1 // pred_region
      %86 = dma.done [#allocation3], 768
    $region29: #{tpu_custom_call.1} parent=1 // pred_fallthru
      _
    // Predicated region
    $region30: #{tpu_custom_call.1} parent=1 // pred_check
      _
    $region31: #{tpu_custom_call.1} parent=1 // pred_check_branch
      %88 = sbr.rel (0) target = $region33
    $region32: #{tpu_custom_call.1} parent=1 // pred_region
      %90 = dma.done [#allocation6], 24576
    $region33: #{tpu_custom_call.1} parent=1 // pred_fallthru
      _
    // Predicated region
    $region34: #{tpu_custom_call.1} parent=1 // pred_check
      _
    $region35: #{tpu_custom_call.1} parent=1 // pred_check_branch
      %92 = sbr.rel (0) target = $region37
    $region36: #{tpu_custom_call.1} parent=1 // pred_region
      %94 = dma.done [#allocation6], 64
    $region37: #{tpu_custom_call.1} parent=1 // pred_fallthru
      _
    // Predicated region
    $region38: #{tpu_custom_call.1} parent=1 // pred_check
      _
    $region39: #{tpu_custom_call.1} parent=1 // pred_check_branch
      %96 = sbr.rel (0) target = $region41
    $region40: #{tpu_custom_call.1} parent=1 // pred_region
      %98 = dma.done [#allocation9], 64
    $region41: #{tpu_custom_call.1} parent=1 // pred_fallthru
      _
    // Predicated region
    $region42: #{tpu_custom_call.1} parent=1 // pred_check
      _
    $region43: #{tpu_custom_call.1} parent=1 // pred_check_branch
      %100 = sbr.rel (0) target = $region45
    $region44: #{tpu_custom_call.1} parent=1 // pred_region
      %102 = dma.done [#allocation9], 96
    $region45: #{tpu_custom_call.1} parent=1 // pred_fallthru
      _
    // Predicated region
    $region46: #{tpu_custom_call.1} parent=1 // pred_check
      _
    $region47: #{tpu_custom_call.1} parent=1 // pred_check_branch
      %104 = sbr.rel (0) target = $region49
    $region48: #{tpu_custom_call.1} parent=1 // pred_region
      %106 = dma.done [#allocation4], 16
    $region49: #{tpu_custom_call.1} parent=1 // pred_fallthru
      _
    %107 = sfence
    %v108 = vld [vmem:[#allocation2] sm:$0xff]
    %v109 = vld [vmem:[#allocation2 + $0x8] sm:$0xff]
    %v110 = vld [vmem:[#allocation2 + $0x10] sm:$0xff]
    %v111 = vld [vmem:[#allocation2 + $0x18] sm:$0xff]
    %v112 = vld [vmem:[#allocation2 + $0x20] sm:$0xff]
    %v113 = vld [vmem:[#allocation2 + $0x28] sm:$0xff]
    %v114 = vld [vmem:[#allocation5] sm:$0xff]
    %v115 = vld [vmem:[#allocation5 + $0x8] sm:$0xff]
    %v116 = vld [vmem:[#allocation5 + $0x10] sm:$0xff]
    %v117 = vld [vmem:[#allocation5 + $0x18] sm:$0xff]
    %v118 = vld [vmem:[#allocation5 + $0x20] sm:$0xff]
    %v119 = vld [vmem:[#allocation5 + $0x28] sm:$0xff]
    %v120 = vld [vmem:[#allocation5 + $0x30] sm:$0xff]
    %v121 = vld [vmem:[#allocation5 + $0x38] sm:$0xff]
    %v122 = vld [vmem:[#allocation5 + $0x40] sm:$0xff]
    %v123 = vld [vmem:[#allocation5 + $0x48] sm:$0xff]
    %v124 = vld [vmem:[#allocation5 + $0x50] sm:$0xff]
    %v125 = vld [vmem:[#allocation5 + $0x58] sm:$0xff]
    %v126 = vld [vmem:[#allocation5 + $0x60] sm:$0xff]
    %v127 = vld [vmem:[#allocation5 + $0x68] sm:$0xff]
    %v128 = vld [vmem:[#allocation5 + $0x70] sm:$0xff]
    %v129 = vld [vmem:[#allocation5 + $0x78] sm:$0xff]
    %v130 = vld [vmem:[#allocation5 + $0x80] sm:$0xff]
    %v131 = vld [vmem:[#allocation5 + $0x88] sm:$0xff]
    %v132 = vld [vmem:[#allocation5 + $0x90] sm:$0xff]
    %v133 = vld [vmem:[#allocation5 + $0x98] sm:$0xff]
    %v134 = vld [vmem:[#allocation5 + $0xa0] sm:$0xff]
    %v135 = vld [vmem:[#allocation5 + $0xa8] sm:$0xff]
    %v136 = vld [vmem:[#allocation5 + $0xb0] sm:$0xff]
    %v137 = vld [vmem:[#allocation5 + $0xb8] sm:$0xff]
    %v138 = vld [vmem:[#allocation5 + $0xc0] sm:$0xff]
    %v139 = vld [vmem:[#allocation5 + $0xc8] sm:$0xff]
    %v140 = vld [vmem:[#allocation5 + $0xd0] sm:$0xff]
    %v141 = vld [vmem:[#allocation5 + $0xd8] sm:$0xff]
    %v142 = vld [vmem:[#allocation5 + $0xe0] sm:$0xff]
    %v143 = vld [vmem:[#allocation5 + $0xe8] sm:$0xff]
    %v144 = vld [vmem:[#allocation5 + $0xf0] sm:$0xff]
    %v145 = vld [vmem:[#allocation5 + $0xf8] sm:$0xff]
    %v146 = vld [vmem:[#allocation5 + $0x100] sm:$0xff]
    %v147 = vld [vmem:[#allocation5 + $0x108] sm:$0xff]
    %v148 = vld [vmem:[#allocation5 + $0x110] sm:$0xff]
    %v149 = vld [vmem:[#allocation5 + $0x118] sm:$0xff]
    %v150 = vld [vmem:[#allocation5 + $0x120] sm:$0xff]
    %v151 = vld [vmem:[#allocation5 + $0x128] sm:$0xff]
    %v152 = vld [vmem:[#allocation5 + $0x130] sm:$0xff]
    %v153 = vld [vmem:[#allocation5 + $0x138] sm:$0xff]
    %v154 = vld [vmem:[#allocation5 + $0x140] sm:$0xff]
    %v155 = vld [vmem:[#allocation5 + $0x148] sm:$0xff]
    %v156 = vld [vmem:[#allocation5 + $0x150] sm:$0xff]
    %v157 = vld [vmem:[#allocation5 + $0x158] sm:$0xff]
    %v158 = vld [vmem:[#allocation5 + $0x160] sm:$0xff]
    %v159 = vld [vmem:[#allocation5 + $0x168] sm:$0xff]
    %v160 = vld [vmem:[#allocation5 + $0x170] sm:$0xff]
    %v161 = vld [vmem:[#allocation5 + $0x178] sm:$0xff]
    %v162 = vld [vmem:[#allocation5 + $0x180] sm:$0xff]
    %v163 = vld [vmem:[#allocation5 + $0x188] sm:$0xff]
    %v164 = vld [vmem:[#allocation5 + $0x190] sm:$0xff]
    %v165 = vld [vmem:[#allocation5 + $0x198] sm:$0xff]
    %v166 = vld [vmem:[#allocation5 + $0x1a0] sm:$0xff]
    %v167 = vld [vmem:[#allocation5 + $0x1a8] sm:$0xff]
    %v168 = vld [vmem:[#allocation5 + $0x1b0] sm:$0xff]
    %v169 = vld [vmem:[#allocation5 + $0x1b8] sm:$0xff]
    %v170 = vld [vmem:[#allocation5 + $0x1c0] sm:$0xff]
    %v171 = vld [vmem:[#allocation5 + $0x1c8] sm:$0xff]
    %v172 = vld [vmem:[#allocation5 + $0x1d0] sm:$0xff]
    %v173 = vld [vmem:[#allocation5 + $0x1d8] sm:$0xff]
    %v174 = vld [vmem:[#allocation5 + $0x1e0] sm:$0xff]
    %v175 = vld [vmem:[#allocation5 + $0x1e8] sm:$0xff]
    %v176 = vld [vmem:[#allocation5 + $0x1f0] sm:$0xff]
    %v177 = vld [vmem:[#allocation5 + $0x1f8] sm:$0xff]
    %v178 = vld [vmem:[#allocation5 + $0x200] sm:$0xff]
    %v179 = vld [vmem:[#allocation5 + $0x208] sm:$0xff]
    %v180 = vld [vmem:[#allocation5 + $0x210] sm:$0xff]
    %v181 = vld [vmem:[#allocation5 + $0x218] sm:$0xff]
    %v182 = vld [vmem:[#allocation5 + $0x220] sm:$0xff]
    %v183 = vld [vmem:[#allocation5 + $0x228] sm:$0xff]
    %v184 = vld [vmem:[#allocation5 + $0x230] sm:$0xff]
    %v185 = vld [vmem:[#allocation5 + $0x238] sm:$0xff]
    %v186 = vld [vmem:[#allocation5 + $0x240] sm:$0xff]
    %v187 = vld [vmem:[#allocation5 + $0x248] sm:$0xff]
    %v188 = vld [vmem:[#allocation5 + $0x250] sm:$0xff]
    %v189 = vld [vmem:[#allocation5 + $0x258] sm:$0xff]
    %v190 = vld [vmem:[#allocation5 + $0x260] sm:$0xff]
    %v191 = vld [vmem:[#allocation5 + $0x268] sm:$0xff]
    %v192 = vld [vmem:[#allocation5 + $0x270] sm:$0xff]
    %v193 = vld [vmem:[#allocation5 + $0x278] sm:$0xff]
    %v194 = vld [vmem:[#allocation5 + $0x280] sm:$0xff]
    %v195 = vld [vmem:[#allocation5 + $0x288] sm:$0xff]
    %v196 = vld [vmem:[#allocation5 + $0x290] sm:$0xff]
    %v197 = vld [vmem:[#allocation5 + $0x298] sm:$0xff]
    %v198 = vld [vmem:[#allocation5 + $0x2a0] sm:$0xff]
    %v199 = vld [vmem:[#allocation5 + $0x2a8] sm:$0xff]
    %v200 = vld [vmem:[#allocation5 + $0x2b0] sm:$0xff]
    %v201 = vld [vmem:[#allocation5 + $0x2b8] sm:$0xff]
    %v202 = vld [vmem:[#allocation5 + $0x2c0] sm:$0xff]
    %v203 = vld [vmem:[#allocation5 + $0x2c8] sm:$0xff]
    %v204 = vld [vmem:[#allocation5 + $0x2d0] sm:$0xff]
    %v205 = vld [vmem:[#allocation5 + $0x2d8] sm:$0xff]
    %v206 = vld [vmem:[#allocation5 + $0x2e0] sm:$0xff]
    %v207 = vld [vmem:[#allocation5 + $0x2e8] sm:$0xff]
    %v208 = vld [vmem:[#allocation5 + $0x2f0] sm:$0xff]
    %v209 = vld [vmem:[#allocation5 + $0x2f8] sm:$0xff]
    %v210 = vld [vmem:[#allocation5 + $0x300] sm:$0xff]
    %v211 = vld [vmem:[#allocation5 + $0x308] sm:$0xff]
    %v212 = vld [vmem:[#allocation5 + $0x310] sm:$0xff]
    %v213 = vld [vmem:[#allocation5 + $0x318] sm:$0xff]
    %v214 = vld [vmem:[#allocation5 + $0x320] sm:$0xff]
    %v215 = vld [vmem:[#allocation5 + $0x328] sm:$0xff]
    %v216 = vld [vmem:[#allocation5 + $0x330] sm:$0xff]
    %v217 = vld [vmem:[#allocation5 + $0x338] sm:$0xff]
    %v218 = vld [vmem:[#allocation5 + $0x340] sm:$0xff]
    %v219 = vld [vmem:[#allocation5 + $0x348] sm:$0xff]
    %v220 = vld [vmem:[#allocation5 + $0x350] sm:$0xff]
    %v221 = vld [vmem:[#allocation5 + $0x358] sm:$0xff]
    %v222 = vld [vmem:[#allocation5 + $0x360] sm:$0xff]
    %v223 = vld [vmem:[#allocation5 + $0x368] sm:$0xff]
    %v224 = vld [vmem:[#allocation5 + $0x370] sm:$0xff]
    %v225 = vld [vmem:[#allocation5 + $0x378] sm:$0xff]
    %v226 = vld [vmem:[#allocation5 + $0x380] sm:$0xff]
    %v227 = vld [vmem:[#allocation5 + $0x388] sm:$0xff]
    %v228 = vld [vmem:[#allocation5 + $0x390] sm:$0xff]
    %v229 = vld [vmem:[#allocation5 + $0x398] sm:$0xff]
    %v230 = vld [vmem:[#allocation5 + $0x3a0] sm:$0xff]
    %v231 = vld [vmem:[#allocation5 + $0x3a8] sm:$0xff]
    %v232 = vld [vmem:[#allocation5 + $0x3b0] sm:$0xff]
    %v233 = vld [vmem:[#allocation5 + $0x3b8] sm:$0xff]
    %v234 = vld [vmem:[#allocation5 + $0x3c0] sm:$0xff]
    %v235 = vld [vmem:[#allocation5 + $0x3c8] sm:$0xff]
    %v236 = vld [vmem:[#allocation5 + $0x3d0] sm:$0xff]
    %v237 = vld [vmem:[#allocation5 + $0x3d8] sm:$0xff]
    %v238 = vld [vmem:[#allocation5 + $0x3e0] sm:$0xff]
    %v239 = vld [vmem:[#allocation5 + $0x3e8] sm:$0xff]
    %v240 = vld [vmem:[#allocation5 + $0x3f0] sm:$0xff]
    %v241 = vld [vmem:[#allocation5 + $0x3f8] sm:$0xff]
    %v242 = vld [vmem:[#allocation5 + $0x400] sm:$0xff]
    %v243 = vld [vmem:[#allocation5 + $0x408] sm:$0xff]
    %v244 = vld [vmem:[#allocation5 + $0x410] sm:$0xff]
    %v245 = vld [vmem:[#allocation5 + $0x418] sm:$0xff]
    %v246 = vld [vmem:[#allocation5 + $0x420] sm:$0xff]
    %v247 = vld [vmem:[#allocation5 + $0x428] sm:$0xff]
    %v248 = vld [vmem:[#allocation5 + $0x430] sm:$0xff]
    %v249 = vld [vmem:[#allocation5 + $0x438] sm:$0xff]
    %v250 = vld [vmem:[#allocation5 + $0x440] sm:$0xff]
    %v251 = vld [vmem:[#allocation5 + $0x448] sm:$0xff]
    %v252 = vld [vmem:[#allocation5 + $0x450] sm:$0xff]
    %v253 = vld [vmem:[#allocation5 + $0x458] sm:$0xff]
    %v254 = vld [vmem:[#allocation5 + $0x460] sm:$0xff]
    %v255 = vld [vmem:[#allocation5 + $0x468] sm:$0xff]
    %v256 = vld [vmem:[#allocation5 + $0x470] sm:$0xff]
    %v257 = vld [vmem:[#allocation5 + $0x478] sm:$0xff]
    %v258 = vld [vmem:[#allocation5 + $0x480] sm:$0xff]
    %v259 = vld [vmem:[#allocation5 + $0x488] sm:$0xff]
    %v260 = vld [vmem:[#allocation5 + $0x490] sm:$0xff]
    %v261 = vld [vmem:[#allocation5 + $0x498] sm:$0xff]
    %v262 = vld [vmem:[#allocation5 + $0x4a0] sm:$0xff]
    %v263 = vld [vmem:[#allocation5 + $0x4a8] sm:$0xff]
    %v264 = vld [vmem:[#allocation5 + $0x4b0] sm:$0xff]
    %v265 = vld [vmem:[#allocation5 + $0x4b8] sm:$0xff]
    %v266 = vld [vmem:[#allocation5 + $0x4c0] sm:$0xff]
    %v267 = vld [vmem:[#allocation5 + $0x4c8] sm:$0xff]
    %v268 = vld [vmem:[#allocation5 + $0x4d0] sm:$0xff]
    %v269 = vld [vmem:[#allocation5 + $0x4d8] sm:$0xff]
    %v270 = vld [vmem:[#allocation5 + $0x4e0] sm:$0xff]
    %v271 = vld [vmem:[#allocation5 + $0x4e8] sm:$0xff]
    %v272 = vld [vmem:[#allocation5 + $0x4f0] sm:$0xff]
    %v273 = vld [vmem:[#allocation5 + $0x4f8] sm:$0xff]
    %v274 = vld [vmem:[#allocation5 + $0x500] sm:$0xff]
    %v275 = vld [vmem:[#allocation5 + $0x508] sm:$0xff]
    %v276 = vld [vmem:[#allocation5 + $0x510] sm:$0xff]
    %v277 = vld [vmem:[#allocation5 + $0x518] sm:$0xff]
    %v278 = vld [vmem:[#allocation5 + $0x520] sm:$0xff]
    %v279 = vld [vmem:[#allocation5 + $0x528] sm:$0xff]
    %v280 = vld [vmem:[#allocation5 + $0x530] sm:$0xff]
    %v281 = vld [vmem:[#allocation5 + $0x538] sm:$0xff]
    %v282 = vld [vmem:[#allocation5 + $0x540] sm:$0xff]
    %v283 = vld [vmem:[#allocation5 + $0x548] sm:$0xff]
    %v284 = vld [vmem:[#allocation5 + $0x550] sm:$0xff]
    %v285 = vld [vmem:[#allocation5 + $0x558] sm:$0xff]
    %v286 = vld [vmem:[#allocation5 + $0x560] sm:$0xff]
    %v287 = vld [vmem:[#allocation5 + $0x568] sm:$0xff]
    %v288 = vld [vmem:[#allocation5 + $0x570] sm:$0xff]
    %v289 = vld [vmem:[#allocation5 + $0x578] sm:$0xff]
    %v290 = vld [vmem:[#allocation5 + $0x580] sm:$0xff]
    %v291 = vld [vmem:[#allocation5 + $0x588] sm:$0xff]
    %v292 = vld [vmem:[#allocation5 + $0x590] sm:$0xff]
    %v293 = vld [vmem:[#allocation5 + $0x598] sm:$0xff]
    %v294 = vld [vmem:[#allocation5 + $0x5a0] sm:$0xff]
    %v295 = vld [vmem:[#allocation5 + $0x5a8] sm:$0xff]
    %v296 = vld [vmem:[#allocation5 + $0x5b0] sm:$0xff]
    %v297 = vld [vmem:[#allocation5 + $0x5b8] sm:$0xff]
    %v298 = vld [vmem:[#allocation5 + $0x5c0] sm:$0xff]
    %v299 = vld [vmem:[#allocation5 + $0x5c8] sm:$0xff]
    %v300 = vld [vmem:[#allocation5 + $0x5d0] sm:$0xff]
    %v301 = vld [vmem:[#allocation5 + $0x5d8] sm:$0xff]
    %v302 = vld [vmem:[#allocation5 + $0x5e0] sm:$0xff]
    %v303 = vld [vmem:[#allocation5 + $0x5e8] sm:$0xff]
    %v304 = vld [vmem:[#allocation5 + $0x5f0] sm:$0xff]
    %v305 = vld [vmem:[#allocation5 + $0x5f8] sm:$0xff]
    %v306 = vld [vmem:[#allocation7] sm:$0xf]
    %v308 = vperm.slane %v306, 0
    %v309 = vperm.slane %v306, 1
    %v310 = vperm.slane %v306, 2
    %v311 = vperm.slane %v306, 3
    %v322 = vunpack.c.l.b16 %v108
    %v323 = vunpack.c.h.b16 %v108
    %v324 = vunpack.c.l.b16 %v109
    %v325 = vunpack.c.h.b16 %v109
    %v326 = vunpack.c.l.b16 %v110
    %v327 = vunpack.c.h.b16 %v110
    %v328 = vunpack.c.l.b16 %v111
    %v329 = vunpack.c.h.b16 %v111
    %v330 = vunpack.c.l.b16 %v112
    %v331 = vunpack.c.h.b16 %v112
    %v332 = vunpack.c.l.b16 %v113
    %v333 = vunpack.c.h.b16 %v113
    %v334 = vpack.c.b16 %v328, %v322
    %v335 = vpack.c.b16 %v329, %v323
    %v336 = vpack.c.b16 %v330, %v324
    %v337 = vpack.c.b16 %v331, %v325
    %v338 = vpack.c.b16 %v332, %v326
    %v339 = vpack.c.b16 %v333, %v327
    %v538 = vunpack.c.l.b16 %v114
    %v539 = vunpack.c.h.b16 %v114
    %v540 = vunpack.c.l.b16 %v115
    %v541 = vunpack.c.h.b16 %v115
    %v542 = vunpack.c.l.b16 %v116
    %v543 = vunpack.c.h.b16 %v116
    %v544 = vunpack.c.l.b16 %v117
    %v545 = vunpack.c.h.b16 %v117
    %v546 = vunpack.c.l.b16 %v118
    %v547 = vunpack.c.h.b16 %v118
    %v548 = vunpack.c.l.b16 %v119
    %v549 = vunpack.c.h.b16 %v119
    %v550 = vunpack.c.l.b16 %v120
    %v551 = vunpack.c.h.b16 %v120
    %v552 = vunpack.c.l.b16 %v121
    %v553 = vunpack.c.h.b16 %v121
    %v554 = vunpack.c.l.b16 %v122
    %v555 = vunpack.c.h.b16 %v122
    %v556 = vunpack.c.l.b16 %v123
    %v557 = vunpack.c.h.b16 %v123
    %v558 = vunpack.c.l.b16 %v124
    %v559 = vunpack.c.h.b16 %v124
    %v560 = vunpack.c.l.b16 %v125
    %v561 = vunpack.c.h.b16 %v125
    %v562 = vunpack.c.l.b16 %v126
    %v563 = vunpack.c.h.b16 %v126
    %v564 = vunpack.c.l.b16 %v127
    %v565 = vunpack.c.h.b16 %v127
    %v566 = vunpack.c.l.b16 %v128
    %v567 = vunpack.c.h.b16 %v128
    %v568 = vunpack.c.l.b16 %v129
    %v569 = vunpack.c.h.b16 %v129
    %v570 = vunpack.c.l.b16 %v130
    %v571 = vunpack.c.h.b16 %v130
    %v572 = vunpack.c.l.b16 %v131
    %v573 = vunpack.c.h.b16 %v131
    %v574 = vunpack.c.l.b16 %v132
    %v575 = vunpack.c.h.b16 %v132
    %v576 = vunpack.c.l.b16 %v133
    %v577 = vunpack.c.h.b16 %v133
    %v578 = vunpack.c.l.b16 %v134
    %v579 = vunpack.c.h.b16 %v134
    %v580 = vunpack.c.l.b16 %v135
    %v581 = vunpack.c.h.b16 %v135
    %v582 = vunpack.c.l.b16 %v136
    %v583 = vunpack.c.h.b16 %v136
    %v584 = vunpack.c.l.b16 %v137
    %v585 = vunpack.c.h.b16 %v137
    %v586 = vunpack.c.l.b16 %v138
    %v587 = vunpack.c.h.b16 %v138
    %v588 = vunpack.c.l.b16 %v139
    %v589 = vunpack.c.h.b16 %v139
    %v590 = vunpack.c.l.b16 %v140
    %v591 = vunpack.c.h.b16 %v140
    %v592 = vunpack.c.l.b16 %v141
    %v593 = vunpack.c.h.b16 %v141
    %v594 = vunpack.c.l.b16 %v142
    %v595 = vunpack.c.h.b16 %v142
    %v596 = vunpack.c.l.b16 %v143
    %v597 = vunpack.c.h.b16 %v143
    %v598 = vunpack.c.l.b16 %v144
    %v599 = vunpack.c.h.b16 %v144
    %v600 = vunpack.c.l.b16 %v145
    %v601 = vunpack.c.h.b16 %v145
    %v602 = vunpack.c.l.b16 %v146
    %v603 = vunpack.c.h.b16 %v146
    %v604 = vunpack.c.l.b16 %v147
    %v605 = vunpack.c.h.b16 %v147
    %v606 = vunpack.c.l.b16 %v148
    %v607 = vunpack.c.h.b16 %v148
    %v608 = vunpack.c.l.b16 %v149
    %v609 = vunpack.c.h.b16 %v149
    %v610 = vunpack.c.l.b16 %v150
    %v611 = vunpack.c.h.b16 %v150
    %v612 = vunpack.c.l.b16 %v151
    %v613 = vunpack.c.h.b16 %v151
    %v614 = vunpack.c.l.b16 %v152
    %v615 = vunpack.c.h.b16 %v152
    %v616 = vunpack.c.l.b16 %v153
    %v617 = vunpack.c.h.b16 %v153
    %v618 = vunpack.c.l.b16 %v154
    %v619 = vunpack.c.h.b16 %v154
    %v620 = vunpack.c.l.b16 %v155
    %v621 = vunpack.c.h.b16 %v155
    %v622 = vunpack.c.l.b16 %v156
    %v623 = vunpack.c.h.b16 %v156
    %v624 = vunpack.c.l.b16 %v157
    %v625 = vunpack.c.h.b16 %v157
    %v626 = vunpack.c.l.b16 %v158
    %v627 = vunpack.c.h.b16 %v158
    %v628 = vunpack.c.l.b16 %v159
    %v629 = vunpack.c.h.b16 %v159
    %v630 = vunpack.c.l.b16 %v160
    %v631 = vunpack.c.h.b16 %v160
    %v632 = vunpack.c.l.b16 %v161
    %v633 = vunpack.c.h.b16 %v161
    %v634 = vunpack.c.l.b16 %v162
    %v635 = vunpack.c.h.b16 %v162
    %v636 = vunpack.c.l.b16 %v163
    %v637 = vunpack.c.h.b16 %v163
    %v638 = vunpack.c.l.b16 %v164
    %v639 = vunpack.c.h.b16 %v164
    %v640 = vunpack.c.l.b16 %v165
    %v641 = vunpack.c.h.b16 %v165
    %v642 = vunpack.c.l.b16 %v166
    %v643 = vunpack.c.h.b16 %v166
    %v644 = vunpack.c.l.b16 %v167
    %v645 = vunpack.c.h.b16 %v167
    %v646 = vunpack.c.l.b16 %v168
    %v647 = vunpack.c.h.b16 %v168
    %v648 = vunpack.c.l.b16 %v169
    %v649 = vunpack.c.h.b16 %v169
    %v650 = vunpack.c.l.b16 %v170
    %v651 = vunpack.c.h.b16 %v170
    %v652 = vunpack.c.l.b16 %v171
    %v653 = vunpack.c.h.b16 %v171
    %v654 = vunpack.c.l.b16 %v172
    %v655 = vunpack.c.h.b16 %v172
    %v656 = vunpack.c.l.b16 %v173
    %v657 = vunpack.c.h.b16 %v173
    %v658 = vunpack.c.l.b16 %v174
    %v659 = vunpack.c.h.b16 %v174
    %v660 = vunpack.c.l.b16 %v175
    %v661 = vunpack.c.h.b16 %v175
    %v662 = vunpack.c.l.b16 %v176
    %v663 = vunpack.c.h.b16 %v176
    %v664 = vunpack.c.l.b16 %v177
    %v665 = vunpack.c.h.b16 %v177
    %v666 = vunpack.c.l.b16 %v178
    %v667 = vunpack.c.h.b16 %v178
    %v668 = vunpack.c.l.b16 %v179
    %v669 = vunpack.c.h.b16 %v179
    %v670 = vunpack.c.l.b16 %v180
    %v671 = vunpack.c.h.b16 %v180
    %v672 = vunpack.c.l.b16 %v181
    %v673 = vunpack.c.h.b16 %v181
    %v674 = vunpack.c.l.b16 %v182
    %v675 = vunpack.c.h.b16 %v182
    %v676 = vunpack.c.l.b16 %v183
    %v677 = vunpack.c.h.b16 %v183
    %v678 = vunpack.c.l.b16 %v184
    %v679 = vunpack.c.h.b16 %v184
    %v680 = vunpack.c.l.b16 %v185
    %v681 = vunpack.c.h.b16 %v185
    %v682 = vunpack.c.l.b16 %v186
    %v683 = vunpack.c.h.b16 %v186
    %v684 = vunpack.c.l.b16 %v187
    %v685 = vunpack.c.h.b16 %v187
    %v686 = vunpack.c.l.b16 %v188
    %v687 = vunpack.c.h.b16 %v188
    %v688 = vunpack.c.l.b16 %v189
    %v689 = vunpack.c.h.b16 %v189
    %v690 = vunpack.c.l.b16 %v190
    %v691 = vunpack.c.h.b16 %v190
    %v692 = vunpack.c.l.b16 %v191
    %v693 = vunpack.c.h.b16 %v191
    %v694 = vunpack.c.l.b16 %v192
    %v695 = vunpack.c.h.b16 %v192
    %v696 = vunpack.c.l.b16 %v193
    %v697 = vunpack.c.h.b16 %v193
    %v698 = vunpack.c.l.b16 %v194
    %v699 = vunpack.c.h.b16 %v194
    %v700 = vunpack.c.l.b16 %v195
    %v701 = vunpack.c.h.b16 %v195
    %v702 = vunpack.c.l.b16 %v196
    %v703 = vunpack.c.h.b16 %v196
    %v704 = vunpack.c.l.b16 %v197
    %v705 = vunpack.c.h.b16 %v197
    %v706 = vunpack.c.l.b16 %v198
    %v707 = vunpack.c.h.b16 %v198
    %v708 = vunpack.c.l.b16 %v199
    %v709 = vunpack.c.h.b16 %v199
    %v710 = vunpack.c.l.b16 %v200
    %v711 = vunpack.c.h.b16 %v200
    %v712 = vunpack.c.l.b16 %v201
    %v713 = vunpack.c.h.b16 %v201
    %v714 = vunpack.c.l.b16 %v202
    %v715 = vunpack.c.h.b16 %v202
    %v716 = vunpack.c.l.b16 %v203
    %v717 = vunpack.c.h.b16 %v203
    %v718 = vunpack.c.l.b16 %v204
    %v719 = vunpack.c.h.b16 %v204
    %v720 = vunpack.c.l.b16 %v205
    %v721 = vunpack.c.h.b16 %v205
    %v722 = vunpack.c.l.b16 %v206
    %v723 = vunpack.c.h.b16 %v206
    %v724 = vunpack.c.l.b16 %v207
    %v725 = vunpack.c.h.b16 %v207
    %v726 = vunpack.c.l.b16 %v208
    %v727 = vunpack.c.h.b16 %v208
    %v728 = vunpack.c.l.b16 %v209
    %v729 = vunpack.c.h.b16 %v209
    %v730 = vunpack.c.l.b16 %v210
    %v731 = vunpack.c.h.b16 %v210
    %v732 = vunpack.c.l.b16 %v211
    %v733 = vunpack.c.h.b16 %v211
    %v734 = vunpack.c.l.b16 %v212
    %v735 = vunpack.c.h.b16 %v212
    %v736 = vunpack.c.l.b16 %v213
    %v737 = vunpack.c.h.b16 %v213
    %v738 = vunpack.c.l.b16 %v214
    %v739 = vunpack.c.h.b16 %v214
    %v740 = vunpack.c.l.b16 %v215
    %v741 = vunpack.c.h.b16 %v215
    %v742 = vunpack.c.l.b16 %v216
    %v743 = vunpack.c.h.b16 %v216
    %v744 = vunpack.c.l.b16 %v217
    %v745 = vunpack.c.h.b16 %v217
    %v746 = vunpack.c.l.b16 %v218
    %v747 = vunpack.c.h.b16 %v218
    %v748 = vunpack.c.l.b16 %v219
    %v749 = vunpack.c.h.b16 %v219
    %v750 = vunpack.c.l.b16 %v220
    %v751 = vunpack.c.h.b16 %v220
    %v752 = vunpack.c.l.b16 %v221
    %v753 = vunpack.c.h.b16 %v221
    %v754 = vunpack.c.l.b16 %v222
    %v755 = vunpack.c.h.b16 %v222
    %v756 = vunpack.c.l.b16 %v223
    %v757 = vunpack.c.h.b16 %v223
    %v758 = vunpack.c.l.b16 %v224
    %v759 = vunpack.c.h.b16 %v224
    %v760 = vunpack.c.l.b16 %v225
    %v761 = vunpack.c.h.b16 %v225
    %v762 = vunpack.c.l.b16 %v226
    %v763 = vunpack.c.h.b16 %v226
    %v764 = vunpack.c.l.b16 %v227
    %v765 = vunpack.c.h.b16 %v227
    %v766 = vunpack.c.l.b16 %v228
    %v767 = vunpack.c.h.b16 %v228
    %v768 = vunpack.c.l.b16 %v229
    %v769 = vunpack.c.h.b16 %v229
    %v770 = vunpack.c.l.b16 %v230
    %v771 = vunpack.c.h.b16 %v230
    %v772 = vunpack.c.l.b16 %v231
    %v773 = vunpack.c.h.b16 %v231
    %v774 = vunpack.c.l.b16 %v232
    %v775 = vunpack.c.h.b16 %v232
    %v776 = vunpack.c.l.b16 %v233
    %v777 = vunpack.c.h.b16 %v233
    %v778 = vunpack.c.l.b16 %v234
    %v779 = vunpack.c.h.b16 %v234
    %v780 = vunpack.c.l.b16 %v235
    %v781 = vunpack.c.h.b16 %v235
    %v782 = vunpack.c.l.b16 %v236
    %v783 = vunpack.c.h.b16 %v236
    %v784 = vunpack.c.l.b16 %v237
    %v785 = vunpack.c.h.b16 %v237
    %v786 = vunpack.c.l.b16 %v238
    %v787 = vunpack.c.h.b16 %v238
    %v788 = vunpack.c.l.b16 %v239
    %v789 = vunpack.c.h.b16 %v239
    %v790 = vunpack.c.l.b16 %v240
    %v791 = vunpack.c.h.b16 %v240
    %v792 = vunpack.c.l.b16 %v241
    %v793 = vunpack.c.h.b16 %v241
    %v794 = vunpack.c.l.b16 %v242
    %v795 = vunpack.c.h.b16 %v242
    %v796 = vunpack.c.l.b16 %v243
    %v797 = vunpack.c.h.b16 %v243
    %v798 = vunpack.c.l.b16 %v244
    %v799 = vunpack.c.h.b16 %v244
    %v800 = vunpack.c.l.b16 %v245
    %v801 = vunpack.c.h.b16 %v245
    %v802 = vunpack.c.l.b16 %v246
    %v803 = vunpack.c.h.b16 %v246
    %v804 = vunpack.c.l.b16 %v247
    %v805 = vunpack.c.h.b16 %v247
    %v806 = vunpack.c.l.b16 %v248
    %v807 = vunpack.c.h.b16 %v248
    %v808 = vunpack.c.l.b16 %v249
    %v809 = vunpack.c.h.b16 %v249
    %v810 = vunpack.c.l.b16 %v250
    %v811 = vunpack.c.h.b16 %v250
    %v812 = vunpack.c.l.b16 %v251
    %v813 = vunpack.c.h.b16 %v251
    %v814 = vunpack.c.l.b16 %v252
    %v815 = vunpack.c.h.b16 %v252
    %v816 = vunpack.c.l.b16 %v253
    %v817 = vunpack.c.h.b16 %v253
    %v818 = vunpack.c.l.b16 %v254
    %v819 = vunpack.c.h.b16 %v254
    %v820 = vunpack.c.l.b16 %v255
    %v821 = vunpack.c.h.b16 %v255
    %v822 = vunpack.c.l.b16 %v256
    %v823 = vunpack.c.h.b16 %v256
    %v824 = vunpack.c.l.b16 %v257
    %v825 = vunpack.c.h.b16 %v257
    %v826 = vunpack.c.l.b16 %v258
    %v827 = vunpack.c.h.b16 %v258
    %v828 = vunpack.c.l.b16 %v259
    %v829 = vunpack.c.h.b16 %v259
    %v830 = vunpack.c.l.b16 %v260
    %v831 = vunpack.c.h.b16 %v260
    %v832 = vunpack.c.l.b16 %v261
    %v833 = vunpack.c.h.b16 %v261
    %v834 = vunpack.c.l.b16 %v262
    %v835 = vunpack.c.h.b16 %v262
    %v836 = vunpack.c.l.b16 %v263
    %v837 = vunpack.c.h.b16 %v263
    %v838 = vunpack.c.l.b16 %v264
    %v839 = vunpack.c.h.b16 %v264
    %v840 = vunpack.c.l.b16 %v265
    %v841 = vunpack.c.h.b16 %v265
    %v842 = vunpack.c.l.b16 %v266
    %v843 = vunpack.c.h.b16 %v266
    %v844 = vunpack.c.l.b16 %v267
    %v845 = vunpack.c.h.b16 %v267
    %v846 = vunpack.c.l.b16 %v268
    %v847 = vunpack.c.h.b16 %v268
    %v848 = vunpack.c.l.b16 %v269
    %v849 = vunpack.c.h.b16 %v269
    %v850 = vunpack.c.l.b16 %v270
    %v851 = vunpack.c.h.b16 %v270
    %v852 = vunpack.c.l.b16 %v271
    %v853 = vunpack.c.h.b16 %v271
    %v854 = vunpack.c.l.b16 %v272
    %v855 = vunpack.c.h.b16 %v272
    %v856 = vunpack.c.l.b16 %v273
    %v857 = vunpack.c.h.b16 %v273
    %v858 = vunpack.c.l.b16 %v274
    %v859 = vunpack.c.h.b16 %v274
    %v860 = vunpack.c.l.b16 %v275
    %v861 = vunpack.c.h.b16 %v275
    %v862 = vunpack.c.l.b16 %v276
    %v863 = vunpack.c.h.b16 %v276
    %v864 = vunpack.c.l.b16 %v277
    %v865 = vunpack.c.h.b16 %v277
    %v866 = vunpack.c.l.b16 %v278
    %v867 = vunpack.c.h.b16 %v278
    %v868 = vunpack.c.l.b16 %v279
    %v869 = vunpack.c.h.b16 %v279
    %v870 = vunpack.c.l.b16 %v280
    %v871 = vunpack.c.h.b16 %v280
    %v872 = vunpack.c.l.b16 %v281
    %v873 = vunpack.c.h.b16 %v281
    %v874 = vunpack.c.l.b16 %v282
    %v875 = vunpack.c.h.b16 %v282
    %v876 = vunpack.c.l.b16 %v283
    %v877 = vunpack.c.h.b16 %v283
    %v878 = vunpack.c.l.b16 %v284
    %v879 = vunpack.c.h.b16 %v284
    %v880 = vunpack.c.l.b16 %v285
    %v881 = vunpack.c.h.b16 %v285
    %v882 = vunpack.c.l.b16 %v286
    %v883 = vunpack.c.h.b16 %v286
    %v884 = vunpack.c.l.b16 %v287
    %v885 = vunpack.c.h.b16 %v287
    %v886 = vunpack.c.l.b16 %v288
    %v887 = vunpack.c.h.b16 %v288
    %v888 = vunpack.c.l.b16 %v289
    %v889 = vunpack.c.h.b16 %v289
    %v890 = vunpack.c.l.b16 %v290
    %v891 = vunpack.c.h.b16 %v290
    %v892 = vunpack.c.l.b16 %v291
    %v893 = vunpack.c.h.b16 %v291
    %v894 = vunpack.c.l.b16 %v292
    %v895 = vunpack.c.h.b16 %v292
    %v896 = vunpack.c.l.b16 %v293
    %v897 = vunpack.c.h.b16 %v293
    %v898 = vunpack.c.l.b16 %v294
    %v899 = vunpack.c.h.b16 %v294
    %v900 = vunpack.c.l.b16 %v295
    %v901 = vunpack.c.h.b16 %v295
    %v902 = vunpack.c.l.b16 %v296
    %v903 = vunpack.c.h.b16 %v296
    %v904 = vunpack.c.l.b16 %v297
    %v905 = vunpack.c.h.b16 %v297
    %v906 = vunpack.c.l.b16 %v298
    %v907 = vunpack.c.h.b16 %v298
    %v908 = vunpack.c.l.b16 %v299
    %v909 = vunpack.c.h.b16 %v299
    %v910 = vunpack.c.l.b16 %v300
    %v911 = vunpack.c.h.b16 %v300
    %v912 = vunpack.c.l.b16 %v301
    %v913 = vunpack.c.h.b16 %v301
    %v914 = vunpack.c.l.b16 %v302
    %v915 = vunpack.c.h.b16 %v302
    %v916 = vunpack.c.l.b16 %v303
    %v917 = vunpack.c.h.b16 %v303
    %v918 = vunpack.c.l.b16 %v304
    %v919 = vunpack.c.h.b16 %v304
    %v920 = vunpack.c.l.b16 %v305
    %v921 = vunpack.c.h.b16 %v305
    %v922 = vpack.c.b16 %v542, %v538
    %v923 = vpack.c.b16 %v543, %v539
    %v924 = vpack.c.b16 %v544, %v540
    %v925 = vpack.c.b16 %v545, %v541
    %v926 = vpack.c.b16 %v550, %v546
    %v927 = vpack.c.b16 %v551, %v547
    %v928 = vpack.c.b16 %v552, %v548
    %v929 = vpack.c.b16 %v553, %v549
    %v930 = vpack.c.b16 %v558, %v554
    %v931 = vpack.c.b16 %v559, %v555
    %v932 = vpack.c.b16 %v560, %v556
    %v933 = vpack.c.b16 %v561, %v557
    %v934 = vpack.c.b16 %v566, %v562
    %v935 = vpack.c.b16 %v567, %v563
    %v936 = vpack.c.b16 %v568, %v564
    %v937 = vpack.c.b16 %v569, %v565
    %v938 = vpack.c.b16 %v574, %v570
    %v939 = vpack.c.b16 %v575, %v571
    %v940 = vpack.c.b16 %v576, %v572
    %v941 = vpack.c.b16 %v577, %v573
    %v942 = vpack.c.b16 %v582, %v578
    %v943 = vpack.c.b16 %v583, %v579
    %v944 = vpack.c.b16 %v584, %v580
    %v945 = vpack.c.b16 %v585, %v581
    %v946 = vpack.c.b16 %v590, %v586
    %v947 = vpack.c.b16 %v591, %v587
    %v948 = vpack.c.b16 %v592, %v588
    %v949 = vpack.c.b16 %v593, %v589
    %v950 = vpack.c.b16 %v598, %v594
    %v951 = vpack.c.b16 %v599, %v595
    %v952 = vpack.c.b16 %v600, %v596
    %v953 = vpack.c.b16 %v601, %v597
    %v954 = vpack.c.b16 %v606, %v602
    %v955 = vpack.c.b16 %v607, %v603
    %v956 = vpack.c.b16 %v608, %v604
    %v957 = vpack.c.b16 %v609, %v605
    %v958 = vpack.c.b16 %v614, %v610
    %v959 = vpack.c.b16 %v615, %v611
    %v960 = vpack.c.b16 %v616, %v612
    %v961 = vpack.c.b16 %v617, %v613
    %v962 = vpack.c.b16 %v622, %v618
    %v963 = vpack.c.b16 %v623, %v619
    %v964 = vpack.c.b16 %v624, %v620
    %v965 = vpack.c.b16 %v625, %v621
    %v966 = vpack.c.b16 %v630, %v626
    %v967 = vpack.c.b16 %v631, %v627
    %v968 = vpack.c.b16 %v632, %v628
    %v969 = vpack.c.b16 %v633, %v629
    %v970 = vpack.c.b16 %v638, %v634
    %v971 = vpack.c.b16 %v639, %v635
    %v972 = vpack.c.b16 %v640, %v636
    %v973 = vpack.c.b16 %v641, %v637
    %v974 = vpack.c.b16 %v646, %v642
    %v975 = vpack.c.b16 %v647, %v643
    %v976 = vpack.c.b16 %v648, %v644
    %v977 = vpack.c.b16 %v649, %v645
    %v978 = vpack.c.b16 %v654, %v650
    %v979 = vpack.c.b16 %v655, %v651
    %v980 = vpack.c.b16 %v656, %v652
    %v981 = vpack.c.b16 %v657, %v653
    %v982 = vpack.c.b16 %v662, %v658
    %v983 = vpack.c.b16 %v663, %v659
    %v984 = vpack.c.b16 %v664, %v660
    %v985 = vpack.c.b16 %v665, %v661
    %v986 = vpack.c.b16 %v670, %v666
    %v987 = vpack.c.b16 %v671, %v667
    %v988 = vpack.c.b16 %v672, %v668
    %v989 = vpack.c.b16 %v673, %v669
    %v990 = vpack.c.b16 %v678, %v674
    %v991 = vpack.c.b16 %v679, %v675
    %v992 = vpack.c.b16 %v680, %v676
    %v993 = vpack.c.b16 %v681, %v677
    %v994 = vpack.c.b16 %v686, %v682
    %v995 = vpack.c.b16 %v687, %v683
    %v996 = vpack.c.b16 %v688, %v684
    %v997 = vpack.c.b16 %v689, %v685
    %v998 = vpack.c.b16 %v694, %v690
    %v999 = vpack.c.b16 %v695, %v691
    %v1000 = vpack.c.b16 %v696, %v692
    %v1001 = vpack.c.b16 %v697, %v693
    %v1002 = vpack.c.b16 %v702, %v698
    %v1003 = vpack.c.b16 %v703, %v699
    %v1004 = vpack.c.b16 %v704, %v700
    %v1005 = vpack.c.b16 %v705, %v701
    %v1006 = vpack.c.b16 %v710, %v706
    %v1007 = vpack.c.b16 %v711, %v707
    %v1008 = vpack.c.b16 %v712, %v708
    %v1009 = vpack.c.b16 %v713, %v709
    %v1010 = vpack.c.b16 %v718, %v714
    %v1011 = vpack.c.b16 %v719, %v715
    %v1012 = vpack.c.b16 %v720, %v716
    %v1013 = vpack.c.b16 %v721, %v717
    %v1014 = vpack.c.b16 %v726, %v722
    %v1015 = vpack.c.b16 %v727, %v723
    %v1016 = vpack.c.b16 %v728, %v724
    %v1017 = vpack.c.b16 %v729, %v725
    %v1018 = vpack.c.b16 %v734, %v730
    %v1019 = vpack.c.b16 %v735, %v731
    %v1020 = vpack.c.b16 %v736, %v732
    %v1021 = vpack.c.b16 %v737, %v733
    %v1022 = vpack.c.b16 %v742, %v738
    %v1023 = vpack.c.b16 %v743, %v739
    %v1024 = vpack.c.b16 %v744, %v740
    %v1025 = vpack.c.b16 %v745, %v741
    %v1026 = vpack.c.b16 %v750, %v746
    %v1027 = vpack.c.b16 %v751, %v747
    %v1028 = vpack.c.b16 %v752, %v748
    %v1029 = vpack.c.b16 %v753, %v749
    %v1030 = vpack.c.b16 %v758, %v754
    %v1031 = vpack.c.b16 %v759, %v755
    %v1032 = vpack.c.b16 %v760, %v756
    %v1033 = vpack.c.b16 %v761, %v757
    %v1034 = vpack.c.b16 %v766, %v762
    %v1035 = vpack.c.b16 %v767, %v763
    %v1036 = vpack.c.b16 %v768, %v764
    %v1037 = vpack.c.b16 %v769, %v765
    %v1038 = vpack.c.b16 %v774, %v770
    %v1039 = vpack.c.b16 %v775, %v771
    %v1040 = vpack.c.b16 %v776, %v772
    %v1041 = vpack.c.b16 %v777, %v773
    %v1042 = vpack.c.b16 %v782, %v778
    %v1043 = vpack.c.b16 %v783, %v779
    %v1044 = vpack.c.b16 %v784, %v780
    %v1045 = vpack.c.b16 %v785, %v781
    %v1046 = vpack.c.b16 %v790, %v786
    %v1047 = vpack.c.b16 %v791, %v787
    %v1048 = vpack.c.b16 %v792, %v788
    %v1049 = vpack.c.b16 %v793, %v789
    %v1050 = vpack.c.b16 %v798, %v794
    %v1051 = vpack.c.b16 %v799, %v795
    %v1052 = vpack.c.b16 %v800, %v796
    %v1053 = vpack.c.b16 %v801, %v797
    %v1054 = vpack.c.b16 %v806, %v802
    %v1055 = vpack.c.b16 %v807, %v803
    %v1056 = vpack.c.b16 %v808, %v804
    %v1057 = vpack.c.b16 %v809, %v805
    %v1058 = vpack.c.b16 %v814, %v810
    %v1059 = vpack.c.b16 %v815, %v811
    %v1060 = vpack.c.b16 %v816, %v812
    %v1061 = vpack.c.b16 %v817, %v813
    %v1062 = vpack.c.b16 %v822, %v818
    %v1063 = vpack.c.b16 %v823, %v819
    %v1064 = vpack.c.b16 %v824, %v820
    %v1065 = vpack.c.b16 %v825, %v821
    %v1066 = vpack.c.b16 %v830, %v826
    %v1067 = vpack.c.b16 %v831, %v827
    %v1068 = vpack.c.b16 %v832, %v828
    %v1069 = vpack.c.b16 %v833, %v829
    %v1070 = vpack.c.b16 %v838, %v834
    %v1071 = vpack.c.b16 %v839, %v835
    %v1072 = vpack.c.b16 %v840, %v836
    %v1073 = vpack.c.b16 %v841, %v837
    %v1074 = vpack.c.b16 %v846, %v842
    %v1075 = vpack.c.b16 %v847, %v843
    %v1076 = vpack.c.b16 %v848, %v844
    %v1077 = vpack.c.b16 %v849, %v845
    %v1078 = vpack.c.b16 %v854, %v850
    %v1079 = vpack.c.b16 %v855, %v851
    %v1080 = vpack.c.b16 %v856, %v852
    %v1081 = vpack.c.b16 %v857, %v853
    %v1082 = vpack.c.b16 %v862, %v858
    %v1083 = vpack.c.b16 %v863, %v859
    %v1084 = vpack.c.b16 %v864, %v860
    %v1085 = vpack.c.b16 %v865, %v861
    %v1086 = vpack.c.b16 %v870, %v866
    %v1087 = vpack.c.b16 %v871, %v867
    %v1088 = vpack.c.b16 %v872, %v868
    %v1089 = vpack.c.b16 %v873, %v869
    %v1090 = vpack.c.b16 %v878, %v874
    %v1091 = vpack.c.b16 %v879, %v875
    %v1092 = vpack.c.b16 %v880, %v876
    %v1093 = vpack.c.b16 %v881, %v877
    %v1094 = vpack.c.b16 %v886, %v882
    %v1095 = vpack.c.b16 %v887, %v883
    %v1096 = vpack.c.b16 %v888, %v884
    %v1097 = vpack.c.b16 %v889, %v885
    %v1098 = vpack.c.b16 %v894, %v890
    %v1099 = vpack.c.b16 %v895, %v891
    %v1100 = vpack.c.b16 %v896, %v892
    %v1101 = vpack.c.b16 %v897, %v893
    %v1102 = vpack.c.b16 %v902, %v898
    %v1103 = vpack.c.b16 %v903, %v899
    %v1104 = vpack.c.b16 %v904, %v900
    %v1105 = vpack.c.b16 %v905, %v901
    %v1106 = vpack.c.b16 %v910, %v906
    %v1107 = vpack.c.b16 %v911, %v907
    %v1108 = vpack.c.b16 %v912, %v908
    %v1109 = vpack.c.b16 %v913, %v909
    %v1110 = vpack.c.b16 %v918, %v914
    %v1111 = vpack.c.b16 %v919, %v915
    %v1112 = vpack.c.b16 %v920, %v916
    %v1113 = vpack.c.b16 %v921, %v917
    %1306 = vmatpush.bf16.msra.mxu0 %v950
    %1307 = vmatpush.bf16.msra.mxu0 %v946
    %1308 = vmatpush.bf16.msra.mxu0 %v942
    %1309 = vmatpush.bf16.msra.mxu0 %v938
    %1310 = vmatpush.bf16.msra.mxu0 %v934
    %1311 = vmatpush.bf16.msra.mxu0 %v930
    %1312 = vmatpush.bf16.msra.mxu0 %v926
    %1313 = vmatpush.bf16.msra.mxu0 %v922
    %1314 = vmatmul.bf16.gmra.mxu0 %v334
    %v1315 = vpop.f32.mrf.mxu0
    %v1316 = vadd.f32 %v308, %v1315
    %v1317 = vpop.f32.mrf.mxu0
    %v1318 = vadd.f32 %v308, %v1317
    %1319 = vdwg.mxu0
    %1320 = vmatpush.bf16.msra.mxu0 %v982
    %1321 = vmatpush.bf16.msra.mxu0 %v978
    %1322 = vmatpush.bf16.msra.mxu0 %v974
    %1323 = vmatpush.bf16.msra.mxu0 %v970
    %1324 = vmatpush.bf16.msra.mxu0 %v966
    %1325 = vmatpush.bf16.msra.mxu0 %v962
    %1326 = vmatpush.bf16.msra.mxu0 %v958
    %1327 = vmatpush.bf16.msra.mxu0 %v954
    %1328 = vmatmul.bf16.gmra.mxu0 %v335
    %v1329 = vpop.f32.mrf.mxu0
    %v1330 = vadd.f32 %v1316, %v1329
    %v1331 = vpop.f32.mrf.mxu0
    %v1332 = vadd.f32 %v1318, %v1331
    %1333 = vdwg.mxu0
    %1334 = vmatpush.bf16.msra.mxu0 %v1014
    %1335 = vmatpush.bf16.msra.mxu0 %v1010
    %1336 = vmatpush.bf16.msra.mxu0 %v1006
    %1337 = vmatpush.bf16.msra.mxu0 %v1002
    %1338 = vmatpush.bf16.msra.mxu0 %v998
    %1339 = vmatpush.bf16.msra.mxu0 %v994
    %1340 = vmatpush.bf16.msra.mxu0 %v990
    %1341 = vmatpush.bf16.msra.mxu0 %v986
    %1342 = vmatmul.bf16.gmra.mxu0 %v336
    %v1343 = vpop.f32.mrf.mxu0
    %v1344 = vadd.f32 %v1330, %v1343
    %v1345 = vpop.f32.mrf.mxu0
    %v1346 = vadd.f32 %v1332, %v1345
    %1347 = vdwg.mxu0
    %1348 = vmatpush.bf16.msra.mxu0 %v1046
    %1349 = vmatpush.bf16.msra.mxu0 %v1042
    %1350 = vmatpush.bf16.msra.mxu0 %v1038
    %1351 = vmatpush.bf16.msra.mxu0 %v1034
    %1352 = vmatpush.bf16.msra.mxu0 %v1030
    %1353 = vmatpush.bf16.msra.mxu0 %v1026
    %1354 = vmatpush.bf16.msra.mxu0 %v1022
    %1355 = vmatpush.bf16.msra.mxu0 %v1018
    %1356 = vmatmul.bf16.gmra.mxu0 %v337
    %v1357 = vpop.f32.mrf.mxu0
    %v1358 = vadd.f32 %v1344, %v1357
    %v1359 = vpop.f32.mrf.mxu0
    %v1360 = vadd.f32 %v1346, %v1359
    %1361 = vdwg.mxu0
    %1362 = vmatpush.bf16.msra.mxu0 %v1078
    %1363 = vmatpush.bf16.msra.mxu0 %v1074
    %1364 = vmatpush.bf16.msra.mxu0 %v1070
    %1365 = vmatpush.bf16.msra.mxu0 %v1066
    %1366 = vmatpush.bf16.msra.mxu0 %v1062
    %1367 = vmatpush.bf16.msra.mxu0 %v1058
    %1368 = vmatpush.bf16.msra.mxu0 %v1054
    %1369 = vmatpush.bf16.msra.mxu0 %v1050
    %1370 = vmatmul.bf16.gmra.mxu0 %v338
    %v1371 = vpop.f32.mrf.mxu0
    %v1372 = vadd.f32 %v1358, %v1371
    %v1373 = vpop.f32.mrf.mxu0
    %v1374 = vadd.f32 %v1360, %v1373
    %1375 = vdwg.mxu0
    %1376 = vmatpush.bf16.msra.mxu0 %v1110
    %1377 = vmatpush.bf16.msra.mxu0 %v1106
    %1378 = vmatpush.bf16.msra.mxu0 %v1102
    %1379 = vmatpush.bf16.msra.mxu0 %v1098
    %1380 = vmatpush.bf16.msra.mxu0 %v1094
    %1381 = vmatpush.bf16.msra.mxu0 %v1090
    %1382 = vmatpush.bf16.msra.mxu0 %v1086
    %1383 = vmatpush.bf16.msra.mxu0 %v1082
    %1384 = vmatmul.bf16.gmra.mxu0 %v339
    %v1385 = vpop.f32.mrf.mxu0
    %v1386 = vadd.f32 %v1372, %v1385
    %v1387 = vpop.f32.mrf.mxu0
    %v1388 = vadd.f32 %v1374, %v1387
    %1389 = vdwg.mxu0
    %1390 = vmatpush.bf16.msra.mxu0 %v951
    %1391 = vmatpush.bf16.msra.mxu0 %v947
    %1392 = vmatpush.bf16.msra.mxu0 %v943
    %1393 = vmatpush.bf16.msra.mxu0 %v939
    %1394 = vmatpush.bf16.msra.mxu0 %v935
    %1395 = vmatpush.bf16.msra.mxu0 %v931
    %1396 = vmatpush.bf16.msra.mxu0 %v927
    %1397 = vmatpush.bf16.msra.mxu0 %v923
    %1398 = vmatmul.bf16.gmra.mxu0 %v334
    %v1399 = vpop.f32.mrf.mxu0
    %v1400 = vadd.f32 %v309, %v1399
    %v1401 = vpop.f32.mrf.mxu0
    %v1402 = vadd.f32 %v309, %v1401
    %1403 = vdwg.mxu0
    %1404 = vmatpush.bf16.msra.mxu0 %v983
    %1405 = vmatpush.bf16.msra.mxu0 %v979
    %1406 = vmatpush.bf16.msra.mxu0 %v975
    %1407 = vmatpush.bf16.msra.mxu0 %v971
    %1408 = vmatpush.bf16.msra.mxu0 %v967
    %1409 = vmatpush.bf16.msra.mxu0 %v963
    %1410 = vmatpush.bf16.msra.mxu0 %v959
    %1411 = vmatpush.bf16.msra.mxu0 %v955
    %1412 = vmatmul.bf16.gmra.mxu0 %v335
    %v1413 = vpop.f32.mrf.mxu0
    %v1414 = vadd.f32 %v1400, %v1413
    %v1415 = vpop.f32.mrf.mxu0
    %v1416 = vadd.f32 %v1402, %v1415
    %1417 = vdwg.mxu0
    %1418 = vmatpush.bf16.msra.mxu0 %v1015
    %1419 = vmatpush.bf16.msra.mxu0 %v1011
    %1420 = vmatpush.bf16.msra.mxu0 %v1007
    %1421 = vmatpush.bf16.msra.mxu0 %v1003
    %1422 = vmatpush.bf16.msra.mxu0 %v999
    %1423 = vmatpush.bf16.msra.mxu0 %v995
    %1424 = vmatpush.bf16.msra.mxu0 %v991
    %1425 = vmatpush.bf16.msra.mxu0 %v987
    %1426 = vmatmul.bf16.gmra.mxu0 %v336
    %v1427 = vpop.f32.mrf.mxu0
    %v1428 = vadd.f32 %v1414, %v1427
    %v1429 = vpop.f32.mrf.mxu0
    %v1430 = vadd.f32 %v1416, %v1429
    %1431 = vdwg.mxu0
    %1432 = vmatpush.bf16.msra.mxu0 %v1047
    %1433 = vmatpush.bf16.msra.mxu0 %v1043
    %1434 = vmatpush.bf16.msra.mxu0 %v1039
    %1435 = vmatpush.bf16.msra.mxu0 %v1035
    %1436 = vmatpush.bf16.msra.mxu0 %v1031
    %1437 = vmatpush.bf16.msra.mxu0 %v1027
    %1438 = vmatpush.bf16.msra.mxu0 %v1023
    %1439 = vmatpush.bf16.msra.mxu0 %v1019
    %1440 = vmatmul.bf16.gmra.mxu0 %v337
    %v1441 = vpop.f32.mrf.mxu0
    %v1442 = vadd.f32 %v1428, %v1441
    %v1443 = vpop.f32.mrf.mxu0
    %v1444 = vadd.f32 %v1430, %v1443
    %1445 = vdwg.mxu0
    %1446 = vmatpush.bf16.msra.mxu0 %v1079
    %1447 = vmatpush.bf16.msra.mxu0 %v1075
    %1448 = vmatpush.bf16.msra.mxu0 %v1071
    %1449 = vmatpush.bf16.msra.mxu0 %v1067
    %1450 = vmatpush.bf16.msra.mxu0 %v1063
    %1451 = vmatpush.bf16.msra.mxu0 %v1059
    %1452 = vmatpush.bf16.msra.mxu0 %v1055
    %1453 = vmatpush.bf16.msra.mxu0 %v1051
    %1454 = vmatmul.bf16.gmra.mxu0 %v338
    %v1455 = vpop.f32.mrf.mxu0
    %v1456 = vadd.f32 %v1442, %v1455
    %v1457 = vpop.f32.mrf.mxu0
    %v1458 = vadd.f32 %v1444, %v1457
    %1459 = vdwg.mxu0
    %1460 = vmatpush.bf16.msra.mxu0 %v1111
    %1461 = vmatpush.bf16.msra.mxu0 %v1107
    %1462 = vmatpush.bf16.msra.mxu0 %v1103
    %1463 = vmatpush.bf16.msra.mxu0 %v1099
    %1464 = vmatpush.bf16.msra.mxu0 %v1095
    %1465 = vmatpush.bf16.msra.mxu0 %v1091
    %1466 = vmatpush.bf16.msra.mxu0 %v1087
    %1467 = vmatpush.bf16.msra.mxu0 %v1083
    %1468 = vmatmul.bf16.gmra.mxu0 %v339
    %v1469 = vpop.f32.mrf.mxu0
    %v1470 = vadd.f32 %v1456, %v1469
    %v1471 = vpop.f32.mrf.mxu0
    %v1472 = vadd.f32 %v1458, %v1471
    %1473 = vdwg.mxu0
    %1474 = vmatpush.bf16.msra.mxu0 %v952
    %1475 = vmatpush.bf16.msra.mxu0 %v948
    %1476 = vmatpush.bf16.msra.mxu0 %v944
    %1477 = vmatpush.bf16.msra.mxu0 %v940
    %1478 = vmatpush.bf16.msra.mxu0 %v936
    %1479 = vmatpush.bf16.msra.mxu0 %v932
    %1480 = vmatpush.bf16.msra.mxu0 %v928
    %1481 = vmatpush.bf16.msra.mxu0 %v924
    %1482 = vmatmul.bf16.gmra.mxu0 %v334
    %v1483 = vpop.f32.mrf.mxu0
    %v1484 = vadd.f32 %v310, %v1483
    %v1485 = vpop.f32.mrf.mxu0
    %v1486 = vadd.f32 %v310, %v1485
    %1487 = vdwg.mxu0
    %1488 = vmatpush.bf16.msra.mxu0 %v984
    %1489 = vmatpush.bf16.msra.mxu0 %v980
    %1490 = vmatpush.bf16.msra.mxu0 %v976
    %1491 = vmatpush.bf16.msra.mxu0 %v972
    %1492 = vmatpush.bf16.msra.mxu0 %v968
    %1493 = vmatpush.bf16.msra.mxu0 %v964
    %1494 = vmatpush.bf16.msra.mxu0 %v960
    %1495 = vmatpush.bf16.msra.mxu0 %v956
    %1496 = vmatmul.bf16.gmra.mxu0 %v335
    %v1497 = vpop.f32.mrf.mxu0
    %v1498 = vadd.f32 %v1484, %v1497
    %v1499 = vpop.f32.mrf.mxu0
    %v1500 = vadd.f32 %v1486, %v1499
    %1501 = vdwg.mxu0
    %1502 = vmatpush.bf16.msra.mxu0 %v1016
    %1503 = vmatpush.bf16.msra.mxu0 %v1012
    %1504 = vmatpush.bf16.msra.mxu0 %v1008
    %1505 = vmatpush.bf16.msra.mxu0 %v1004
    %1506 = vmatpush.bf16.msra.mxu0 %v1000
    %1507 = vmatpush.bf16.msra.mxu0 %v996
    %1508 = vmatpush.bf16.msra.mxu0 %v992
    %1509 = vmatpush.bf16.msra.mxu0 %v988
    %1510 = vmatmul.bf16.gmra.mxu0 %v336
    %v1511 = vpop.f32.mrf.mxu0
    %v1512 = vadd.f32 %v1498, %v1511
    %v1513 = vpop.f32.mrf.mxu0
    %v1514 = vadd.f32 %v1500, %v1513
    %1515 = vdwg.mxu0
    %1516 = vmatpush.bf16.msra.mxu0 %v1048
    %1517 = vmatpush.bf16.msra.mxu0 %v1044
    %1518 = vmatpush.bf16.msra.mxu0 %v1040
    %1519 = vmatpush.bf16.msra.mxu0 %v1036
    %1520 = vmatpush.bf16.msra.mxu0 %v1032
    %1521 = vmatpush.bf16.msra.mxu0 %v1028
    %1522 = vmatpush.bf16.msra.mxu0 %v1024
    %1523 = vmatpush.bf16.msra.mxu0 %v1020
    %1524 = vmatmul.bf16.gmra.mxu0 %v337
    %v1525 = vpop.f32.mrf.mxu0
    %v1526 = vadd.f32 %v1512, %v1525
    %v1527 = vpop.f32.mrf.mxu0
    %v1528 = vadd.f32 %v1514, %v1527
    %1529 = vdwg.mxu0
    %1530 = vmatpush.bf16.msra.mxu0 %v1080
    %1531 = vmatpush.bf16.msra.mxu0 %v1076
    %1532 = vmatpush.bf16.msra.mxu0 %v1072
    %1533 = vmatpush.bf16.msra.mxu0 %v1068
    %1534 = vmatpush.bf16.msra.mxu0 %v1064
    %1535 = vmatpush.bf16.msra.mxu0 %v1060
    %1536 = vmatpush.bf16.msra.mxu0 %v1056
    %1537 = vmatpush.bf16.msra.mxu0 %v1052
    %1538 = vmatmul.bf16.gmra.mxu0 %v338
    %v1539 = vpop.f32.mrf.mxu0
    %v1540 = vadd.f32 %v1526, %v1539
    %v1541 = vpop.f32.mrf.mxu0
    %v1542 = vadd.f32 %v1528, %v1541
    %1543 = vdwg.mxu0
    %1544 = vmatpush.bf16.msra.mxu0 %v1112
    %1545 = vmatpush.bf16.msra.mxu0 %v1108
    %1546 = vmatpush.bf16.msra.mxu0 %v1104
    %1547 = vmatpush.bf16.msra.mxu0 %v1100
    %1548 = vmatpush.bf16.msra.mxu0 %v1096
    %1549 = vmatpush.bf16.msra.mxu0 %v1092
    %1550 = vmatpush.bf16.msra.mxu0 %v1088
    %1551 = vmatpush.bf16.msra.mxu0 %v1084
    %1552 = vmatmul.bf16.gmra.mxu0 %v339
    %v1553 = vpop.f32.mrf.mxu0
    %v1554 = vadd.f32 %v1540, %v1553
    %v1555 = vpop.f32.mrf.mxu0
    %v1556 = vadd.f32 %v1542, %v1555
    %1557 = vdwg.mxu0
    %1558 = vmatpush.bf16.msra.mxu0 %v953
    %1559 = vmatpush.bf16.msra.mxu0 %v949
    %1560 = vmatpush.bf16.msra.mxu0 %v945
    %1561 = vmatpush.bf16.msra.mxu0 %v941
    %1562 = vmatpush.bf16.msra.mxu0 %v937
    %1563 = vmatpush.bf16.msra.mxu0 %v933
    %1564 = vmatpush.bf16.msra.mxu0 %v929
    %1565 = vmatpush.bf16.msra.mxu0 %v925
    %1566 = vmatmul.bf16.gmra.mxu0 %v334
    %v1567 = vpop.f32.mrf.mxu0
    %v1568 = vadd.f32 %v311, %v1567
    %v1569 = vpop.f32.mrf.mxu0
    %v1570 = vadd.f32 %v311, %v1569
    %1571 = vdwg.mxu0
    %1572 = vmatpush.bf16.msra.mxu0 %v985
    %1573 = vmatpush.bf16.msra.mxu0 %v981
    %1574 = vmatpush.bf16.msra.mxu0 %v977
    %1575 = vmatpush.bf16.msra.mxu0 %v973
    %1576 = vmatpush.bf16.msra.mxu0 %v969
    %1577 = vmatpush.bf16.msra.mxu0 %v965
    %1578 = vmatpush.bf16.msra.mxu0 %v961
    %1579 = vmatpush.bf16.msra.mxu0 %v957
    %1580 = vmatmul.bf16.gmra.mxu0 %v335
    %v1581 = vpop.f32.mrf.mxu0
    %v1582 = vadd.f32 %v1568, %v1581
    %v1583 = vpop.f32.mrf.mxu0
    %v1584 = vadd.f32 %v1570, %v1583
    %1585 = vdwg.mxu0
    %1586 = vmatpush.bf16.msra.mxu0 %v1017
    %1587 = vmatpush.bf16.msra.mxu0 %v1013
    %1588 = vmatpush.bf16.msra.mxu0 %v1009
    %1589 = vmatpush.bf16.msra.mxu0 %v1005
    %1590 = vmatpush.bf16.msra.mxu0 %v1001
    %1591 = vmatpush.bf16.msra.mxu0 %v997
    %1592 = vmatpush.bf16.msra.mxu0 %v993
    %1593 = vmatpush.bf16.msra.mxu0 %v989
    %1594 = vmatmul.bf16.gmra.mxu0 %v336
    %v1595 = vpop.f32.mrf.mxu0
    %v1596 = vadd.f32 %v1582, %v1595
    %v1597 = vpop.f32.mrf.mxu0
    %v1598 = vadd.f32 %v1584, %v1597
    %1599 = vdwg.mxu0
    %1600 = vmatpush.bf16.msra.mxu0 %v1049
    %1601 = vmatpush.bf16.msra.mxu0 %v1045
    %1602 = vmatpush.bf16.msra.mxu0 %v1041
    %1603 = vmatpush.bf16.msra.mxu0 %v1037
    %1604 = vmatpush.bf16.msra.mxu0 %v1033
    %1605 = vmatpush.bf16.msra.mxu0 %v1029
    %1606 = vmatpush.bf16.msra.mxu0 %v1025
    %1607 = vmatpush.bf16.msra.mxu0 %v1021
    %1608 = vmatmul.bf16.gmra.mxu0 %v337
    %v1609 = vpop.f32.mrf.mxu0
    %v1610 = vadd.f32 %v1596, %v1609
    %v1611 = vpop.f32.mrf.mxu0
    %v1612 = vadd.f32 %v1598, %v1611
    %1613 = vdwg.mxu0
    %1614 = vmatpush.bf16.msra.mxu0 %v1081
    %1615 = vmatpush.bf16.msra.mxu0 %v1077
    %1616 = vmatpush.bf16.msra.mxu0 %v1073
    %1617 = vmatpush.bf16.msra.mxu0 %v1069
    %1618 = vmatpush.bf16.msra.mxu0 %v1065
    %1619 = vmatpush.bf16.msra.mxu0 %v1061
    %1620 = vmatpush.bf16.msra.mxu0 %v1057
    %1621 = vmatpush.bf16.msra.mxu0 %v1053
    %1622 = vmatmul.bf16.gmra.mxu0 %v338
    %v1623 = vpop.f32.mrf.mxu0
    %v1624 = vadd.f32 %v1610, %v1623
    %v1625 = vpop.f32.mrf.mxu0
    %v1626 = vadd.f32 %v1612, %v1625
    %1627 = vdwg.mxu0
    %1628 = vmatpush.bf16.msra.mxu0 %v1113
    %1629 = vmatpush.bf16.msra.mxu0 %v1109
    %1630 = vmatpush.bf16.msra.mxu0 %v1105
    %1631 = vmatpush.bf16.msra.mxu0 %v1101
    %1632 = vmatpush.bf16.msra.mxu0 %v1097
    %1633 = vmatpush.bf16.msra.mxu0 %v1093
    %1634 = vmatpush.bf16.msra.mxu0 %v1089
    %1635 = vmatpush.bf16.msra.mxu0 %v1085
    %1636 = vmatmul.bf16.gmra.mxu0 %v339
    %v1637 = vpop.f32.mrf.mxu0
    %v1638 = vadd.f32 %v1624, %v1637
    %v1639 = vpop.f32.mrf.mxu0
    %v1640 = vadd.f32 %v1626, %v1639
    %1641 = vdwg.mxu0
    %v1642 = vtanh.pop %v1386
    %v1643 = vtanh.pop %v1470
    %v1644 = vtanh.pop %v1554
    %v1645 = vtanh.pop %v1638
    %v1646 = vtanh.pop %v1388
    %v1647 = vtanh.pop %v1472
    %v1648 = vtanh.pop %v1556
    %v1649 = vtanh.pop %v1640
    %v1650 = vld [vmem:[#allocation8] sm:$0xf]
    %v1652 = vperm.slane %v1650, 0
    %v1653 = vperm.slane %v1650, 1
    %v1654 = vperm.slane %v1650, 2
    %v1655 = vperm.slane %v1650, 3
    %v1660 = vmul.f32 %v1642, %v1652
    %v1661 = vmul.f32 %v1643, %v1653
    %v1662 = vmul.f32 %v1644, %v1654
    %v1663 = vmul.f32 %v1645, %v1655
    %v1664 = vmul.f32 %v1646, %v1652
    %v1665 = vmul.f32 %v1647, %v1653
    %v1666 = vmul.f32 %v1648, %v1654
    %v1667 = vmul.f32 %v1649, %v1655
    %v1668 = vadd.f32 %v1660, %v1661
    %v1669 = vadd.f32 %v1668, %v1662
    %v1670 = vadd.f32 %v1669, %v1663
    %1671 = vadd.xlane.f32.xlu0 %v1670
    %v1672 = vpop.xlane.xlu0 %1671
    %v1673 = vadd.f32 %v1664, %v1665
    %v1674 = vadd.f32 %v1673, %v1666
    %v1675 = vadd.f32 %v1674, %v1667
    %1676 = vadd.xlane.f32.xlu0 %v1675
    %v1677 = vpop.xlane.xlu0 %1676
    %s1678 = sld [smem:[#allocation11]]
    %v1679 = vstv %s1678
    %v1680 = vadd.f32 %v1672, %v1679
    %v1681 = vadd.f32 %v1677, %v1679
    %v1682 = vld [vmem:[#allocation10] sm:$0x3f]
    %v1683 = vrot.slane %v1680, 4
    %v1684 = vmax.f32 %v1680, %v1683
    %v1685 = vrot.slane %v1684, 2
    %v1686 = vmax.f32 %v1684, %v1685
    %v1687 = vrot.slane %v1686, 1
    %v1688 = vmax.f32 %v1686, %v1687
    %v1689 = vsub.f32 %v1680, %v1688
    %v1690 = vmul.f32 %v1689, 1.442695
    %v1691 = vpow.pop %v1690
    %v1692 = vrot.slane %v1691, 4
    %v1693 = vadd.f32 %v1691, %v1692
    %v1694 = vrot.slane %v1693, 2
    %v1695 = vadd.f32 %v1693, %v1694
    %v1696 = vrot.slane %v1695, 1
    %v1697 = vadd.f32 %v1695, %v1696
    %v1698 = vrcp.pop %v1697
    %v1699 = vmul.f32 %v1691, %v1698
    %v1700 = vunpack.c.l.bf16 %v108
    %v1701 = vunpack.c.h.bf16 %v108
    %v1702 = vunpack.c.l.bf16 %v109
    %v1703 = vunpack.c.h.bf16 %v109
    %v1704 = vunpack.c.l.bf16 %v110
    %v1705 = vunpack.c.h.bf16 %v110
    %v1706 = vmul.f32 %v1699, %v1700
    %v1707 = vmul.f32 %v1699, %v1701
    %v1708 = vmul.f32 %v1699, %v1702
    %v1709 = vmul.f32 %v1699, %v1703
    %v1710 = vmul.f32 %v1699, %v1704
    %v1711 = vmul.f32 %v1699, %v1705
    %v1712 = vrot.slane %v1706, 4
    %v1713 = vadd.f32 %v1706, %v1712
    %v1714 = vrot.slane %v1713, 2
    %v1715 = vadd.f32 %v1713, %v1714
    %v1716 = vrot.slane %v1715, 1
    %v1717 = vadd.f32 %v1715, %v1716
    %v1718 = vrot.slane %v1707, 4
    %v1719 = vadd.f32 %v1707, %v1718
    %v1720 = vrot.slane %v1719, 2
    %v1721 = vadd.f32 %v1719, %v1720
    %v1722 = vrot.slane %v1721, 1
    %v1723 = vadd.f32 %v1721, %v1722
    %v1724 = vrot.slane %v1708, 4
    %v1725 = vadd.f32 %v1708, %v1724
    %v1726 = vrot.slane %v1725, 2
    %v1727 = vadd.f32 %v1725, %v1726
    %v1728 = vrot.slane %v1727, 1
    %v1729 = vadd.f32 %v1727, %v1728
    %v1730 = vrot.slane %v1709, 4
    %v1731 = vadd.f32 %v1709, %v1730
    %v1732 = vrot.slane %v1731, 2
    %v1733 = vadd.f32 %v1731, %v1732
    %v1734 = vrot.slane %v1733, 1
    %v1735 = vadd.f32 %v1733, %v1734
    %v1736 = vrot.slane %v1710, 4
    %v1737 = vadd.f32 %v1710, %v1736
    %v1738 = vrot.slane %v1737, 2
    %v1739 = vadd.f32 %v1737, %v1738
    %v1740 = vrot.slane %v1739, 1
    %v1741 = vadd.f32 %v1739, %v1740
    %v1742 = vrot.slane %v1711, 4
    %v1743 = vadd.f32 %v1711, %v1742
    %v1744 = vrot.slane %v1743, 2
    %v1745 = vadd.f32 %v1743, %v1744
    %v1746 = vrot.slane %v1745, 1
    %v1747 = vadd.f32 %v1745, %v1746
    %v1749 = vperm.slane %v1682, 0
    %v1750 = vperm.slane %v1682, 1
    %v1751 = vperm.slane %v1682, 2
    %v1752 = vperm.slane %v1682, 3
    %v1753 = vperm.slane %v1682, 4
    %v1754 = vperm.slane %v1682, 5
    %v1761 = vmul.f32 %v1717, %v1749
    %v1762 = vmul.f32 %v1723, %v1750
    %v1763 = vmul.f32 %v1729, %v1751
    %v1764 = vmul.f32 %v1735, %v1752
    %v1765 = vmul.f32 %v1741, %v1753
    %v1766 = vmul.f32 %v1747, %v1754
    %vm1767 = vcmask 1040384
    %v1768 = vsel %vm1767, %v1761, 0.0
    %v1769 = vsel %vm1767, %v1762, 0.0
    %v1770 = vadd.f32 %v1768, %v1769
    %v1771 = vsel %vm1767, %v1763, 0.0
    %v1772 = vadd.f32 %v1770, %v1771
    %v1773 = vsel %vm1767, %v1764, 0.0
    %v1774 = vadd.f32 %v1772, %v1773
    %v1775 = vsel %vm1767, %v1765, 0.0
    %v1776 = vadd.f32 %v1774, %v1775
    %v1777 = vsel %vm1767, %v1766, 0.0
    %v1778 = vadd.f32 %v1776, %v1777
    %1779 = vadd.xlane.f32.xlu0 %v1778
    %v1780 = vpop.xlane.xlu0 %1779
    %s1781 = sld [smem:[#allocation11 + $0x1]]
    %v1782 = vstv %s1781
    %v1783 = vadd.f32 %v1780, %v1782
    %vm1784 = vcmask 0
    %1785 = vst.msk [vmem:[%s6] sm:$0x1] %vm1784, %v1783
    %v1786 = vrot.slane %v1681, 4
    %v1787 = vmax.f32 %v1681, %v1786
    %v1788 = vrot.slane %v1787, 2
    %v1789 = vmax.f32 %v1787, %v1788
    %v1790 = vrot.slane %v1789, 1
    %v1791 = vmax.f32 %v1789, %v1790
    %v1792 = vsub.f32 %v1681, %v1791
    %v1793 = vmul.f32 %v1792, 1.442695
    %v1794 = vpow.pop %v1793
    %v1795 = vrot.slane %v1794, 4
    %v1796 = vadd.f32 %v1794, %v1795
    %v1797 = vrot.slane %v1796, 2
    %v1798 = vadd.f32 %v1796, %v1797
    %v1799 = vrot.slane %v1798, 1
    %v1800 = vadd.f32 %v1798, %v1799
    %v1801 = vrcp.pop %v1800
    %v1802 = vmul.f32 %v1794, %v1801
    %v1803 = vunpack.c.l.bf16 %v111
    %v1804 = vunpack.c.h.bf16 %v111
    %v1805 = vunpack.c.l.bf16 %v112
    %v1806 = vunpack.c.h.bf16 %v112
    %v1807 = vunpack.c.l.bf16 %v113
    %v1808 = vunpack.c.h.bf16 %v113
    %v1809 = vmul.f32 %v1802, %v1803
    %v1810 = vmul.f32 %v1802, %v1804
    %v1811 = vmul.f32 %v1802, %v1805
    %v1812 = vmul.f32 %v1802, %v1806
    %v1813 = vmul.f32 %v1802, %v1807
    %v1814 = vmul.f32 %v1802, %v1808
    %v1815 = vrot.slane %v1809, 4
    %v1816 = vadd.f32 %v1809, %v1815
    %v1817 = vrot.slane %v1816, 2
    %v1818 = vadd.f32 %v1816, %v1817
    %v1819 = vrot.slane %v1818, 1
    %v1820 = vadd.f32 %v1818, %v1819
    %v1821 = vrot.slane %v1810, 4
    %v1822 = vadd.f32 %v1810, %v1821
    %v1823 = vrot.slane %v1822, 2
    %v1824 = vadd.f32 %v1822, %v1823
    %v1825 = vrot.slane %v1824, 1
    %v1826 = vadd.f32 %v1824, %v1825
    %v1827 = vrot.slane %v1811, 4
    %v1828 = vadd.f32 %v1811, %v1827
    %v1829 = vrot.slane %v1828, 2
    %v1830 = vadd.f32 %v1828, %v1829
    %v1831 = vrot.slane %v1830, 1
    %v1832 = vadd.f32 %v1830, %v1831
    %v1833 = vrot.slane %v1812, 4
    %v1834 = vadd.f32 %v1812, %v1833
    %v1835 = vrot.slane %v1834, 2
    %v1836 = vadd.f32 %v1834, %v1835
    %v1837 = vrot.slane %v1836, 1
    %v1838 = vadd.f32 %v1836, %v1837
    %v1839 = vrot.slane %v1813, 4
    %v1840 = vadd.f32 %v1813, %v1839
    %v1841 = vrot.slane %v1840, 2
    %v1842 = vadd.f32 %v1840, %v1841
    %v1843 = vrot.slane %v1842, 1
    %v1844 = vadd.f32 %v1842, %v1843
    %v1845 = vrot.slane %v1814, 4
    %v1846 = vadd.f32 %v1814, %v1845
    %v1847 = vrot.slane %v1846, 2
    %v1848 = vadd.f32 %v1846, %v1847
    %v1849 = vrot.slane %v1848, 1
    %v1850 = vadd.f32 %v1848, %v1849
    %v1851 = vmul.f32 %v1820, %v1749
    %v1852 = vmul.f32 %v1826, %v1750
    %v1853 = vmul.f32 %v1832, %v1751
    %v1854 = vmul.f32 %v1838, %v1752
    %v1855 = vmul.f32 %v1844, %v1753
    %v1856 = vmul.f32 %v1850, %v1754
    %v1857 = vsel %vm1767, %v1851, 0.0
    %v1858 = vsel %vm1767, %v1852, 0.0
    %v1859 = vadd.f32 %v1857, %v1858
    %v1860 = vsel %vm1767, %v1853, 0.0
    %v1861 = vadd.f32 %v1859, %v1860
    %v1862 = vsel %vm1767, %v1854, 0.0
    %v1863 = vadd.f32 %v1861, %v1862
    %v1864 = vsel %vm1767, %v1855, 0.0
    %v1865 = vadd.f32 %v1863, %v1864
    %v1866 = vsel %vm1767, %v1856, 0.0
    %v1867 = vadd.f32 %v1865, %v1866
    %1868 = vadd.xlane.f32.xlu0 %v1867
    %v1869 = vpop.xlane.xlu0 %1868
    %s1870 = sld [smem:[#allocation11 + $0x1]]
    %v1871 = vstv %s1870
    %v1872 = vadd.f32 %v1869, %v1871
    %1873 = vst.msk [vmem:[%s6 + $0x1] sm:$0x1] %vm1784, %v1872
    // Predicated region
    $region50: #{tpu_custom_call.1} parent=1 // pred_check
      _
    $region51: #{tpu_custom_call.1} parent=1 // pred_check_branch
      %1875 = sbr.rel (0) target = $region53
    $region52: #{tpu_custom_call.1} parent=1 // pred_region
      _
    $region53: #{tpu_custom_call.1} parent=1 // pred_fallthru
      _
    // Predicated region
    $region54: #{tpu_custom_call.1} parent=1 // pred_check
      _
    $region55: #{tpu_custom_call.1} parent=1 // pred_check_branch
      %1877 = sbr.rel (0) target = $region57
    $region56: #{tpu_custom_call.1} parent=1 // pred_region
      _
    $region57: #{tpu_custom_call.1} parent=1 // pred_fallthru
      _
    %1878 = vsyncpa [#allocation3], 1
    %1879 = vsyncpa [#allocation6], 1
    %1880 = vsyncpa [#allocation9], 1
    %1881 = vsyncpa [#allocation4], 1

</llo_original>
